<compile_context>
chip_gen: v7x
topology: tpu7x:2x2x1
jax: 0.10.0
libtpu: 0.0.40
codegen_flags: <defaults>
</compile_context>

<pallas_src>
import jax
import jax.numpy as jnp
from jax.experimental import pallas as pl
from jax.experimental.pallas import tpu as pltpu

TM = 256      # node-row panel (multiple of bf16 sublane tile)
TK = 256      # adjacency K panel
LANE = 128    # feature / hidden / class widths padded to multiples of 128 lanes
GPAD = 16     # graph-count padding (bf16 sublane tile)


def _round_up(n, m):
    return ((n + m - 1) // m) * m


def _vmem_limit(*per_buffer_bytes, margin=8 << 20):
    # BlockSpec buffers are double-buffered; add margin for compiler scratch.
    return int(2 * sum(per_buffer_bytes) + margin)


# ----------------------------- kernels ---------------------------------------


def _pre_kernel(x_ref, w_ref, b_ref, h_ref):
    # pre: Linear(nfeat, nhid) on one row panel (bf16 inputs, f32 accumulation).
    h = jnp.dot(x_ref[...], w_ref[...], preferred_element_type=jnp.float32) + b_ref[...]
    h_ref[...] = h.astype(h_ref.dtype)


def _gin_conv_kernel(adj_ref, h_ref, w1_ref, b1_ref, w2_ref, b2_ref, o_ref, acc_ref):
    # GINConv: nn((1+eps)*h_i + sum_j A_ij h_j); the self term is folded into adj'.
    k = pl.program_id(1)

    @pl.when(k == 0)
    def _():
        acc_ref[...] = jnp.zeros_like(acc_ref)

    # agg accumulation over K panels (f32 scratch).
    acc_ref[...] += jnp.dot(adj_ref[...], h_ref[...],
                            preferred_element_type=jnp.float32)

    @pl.when(k == pl.num_programs(1) - 1)
    def _():
        agg = acc_ref[...]
        # nn = Linear -> ReLU -> Linear (bias / ReLU in f32 on the VPU)
        t = jnp.dot(agg.astype(jnp.bfloat16), w1_ref[...],
                    preferred_element_type=jnp.float32) + b1_ref[...]
        t = jnp.maximum(t, 0.0)
        h = jnp.dot(t.astype(jnp.bfloat16), w2_ref[...],
                    preferred_element_type=jnp.float32) + b2_ref[...]
        # F.relu after the conv; F.dropout(training=False) == identity.
        h = jnp.maximum(h, 0.0)
        o_ref[...] = h.astype(o_ref.dtype)


def _pool_post_readout_kernel(pool_ref, h_ref, wpost_ref, bpost_ref,
                              wro_ref, bro_ref, xp_ref, y_ref):
    i = pl.program_id(0)

    @pl.when(i == 0)
    def _():
        xp_ref[...] = jnp.zeros_like(xp_ref)

    # global_add_pool: accumulate pooled sums panel by panel (f32 output accumulator).
    xp_ref[...] += jnp.dot(pool_ref[...], h_ref[...],
                           preferred_element_type=jnp.float32)

    @pl.when(i == pl.num_programs(0) - 1)
    def _():
        xp = xp_ref[...]
        # post: Linear -> ReLU ; dropout(training=False) == identity ; readout: Linear
        y = jnp.dot(xp.astype(jnp.bfloat16), wpost_ref[...],
                    preferred_element_type=jnp.float32) + bpost_ref[...]
        y = jnp.maximum(y, 0.0)
        y = jnp.dot(y.astype(jnp.bfloat16), wro_ref[...],
                    preferred_element_type=jnp.float32) + bro_ref[...]
        y_ref[...] = y


# ----------------------------- wrapper ----------------------------------------


@jax.jit
def gin_forward(x, adj, pool, params):
    f32, bf16 = jnp.float32, jnp.bfloat16
    N, nfeat = x.shape
    G = pool.shape[0]
    nhid = params["w_pre"].shape[1]
    nclass = params["w_ro"].shape[1]
    nlayer = params["w1"].shape[0]

    Np = _round_up(N, max(TM, TK))
    Fp = _round_up(nfeat, LANE)
    Hp = _round_up(nhid, LANE)
    Cp = _round_up(nclass, LANE)
    Gp = _round_up(G, GPAD)
    n_row = Np // TM
    n_k = Np // TK

    # ---- pad + quantize operands (self-loop folded into adjacency, eps = 0) ----
    x_p = jnp.pad(x, ((0, Np - N), (0, Fp - nfeat))).astype(bf16)
    adj_p = jnp.pad(adj + jnp.eye(N, dtype=adj.dtype),
                    ((0, Np - N), (0, Np - N))).astype(bf16)
    pool_p = jnp.pad(pool, ((0, Gp - G), (0, Np - N))).astype(bf16)

    w_pre = jnp.pad(params["w_pre"], ((0, Fp - nfeat), (0, Hp - nhid))).astype(bf16)
    b_pre = jnp.pad(params["b_pre"], ((0, 0), (0, Hp - nhid))).astype(f32)
    w1 = jnp.pad(params["w1"], ((0, 0), (0, Hp - nhid), (0, Hp - nhid))).astype(bf16)
    b1 = jnp.pad(params["b1"], ((0, 0), (0, 0), (0, Hp - nhid))).astype(f32)
    w2 = jnp.pad(params["w2"], ((0, 0), (0, Hp - nhid), (0, Hp - nhid))).astype(bf16)
    b2 = jnp.pad(params["b2"], ((0, 0), (0, 0), (0, Hp - nhid))).astype(f32)
    w_post = jnp.pad(params["w_post"], ((0, Hp - nhid), (0, Hp - nhid))).astype(bf16)
    b_post = jnp.pad(params["b_post"], ((0, 0), (0, Hp - nhid))).astype(f32)
    w_ro = jnp.pad(params["w_ro"], ((0, Hp - nhid), (0, Cp - nclass))).astype(bf16)
    b_ro = jnp.pad(params["b_ro"], ((0, 0), (0, Cp - nclass))).astype(f32)

    # ---- pre: Linear(nfeat, nhid), row-parallel ----
    h = pl.pallas_call(
        _pre_kernel,
        grid=(n_row,),
        in_specs=[pl.BlockSpec((TM, Fp), lambda i: (i, 0)),
                  pl.BlockSpec((Fp, Hp), lambda i: (0, 0)),
                  pl.BlockSpec((1, Hp), lambda i: (0, 0))],
        out_specs=pl.BlockSpec((TM, Hp), lambda i: (i, 0)),
        out_shape=jax.ShapeDtypeStruct((Np, Hp), bf16),
        compiler_params=pltpu.CompilerParams(
            dimension_semantics=("parallel",),
            vmem_limit_bytes=_vmem_limit(TM * Fp * 2, Fp * Hp * 2,
                                         Hp * 4, TM * Hp * 2)),
    )(x_p, w_pre, b_pre)

    # ---- GIN conv layers: (row panel, K panel) grid, f32 agg accumulator scratch ----
    conv_cost = pl.CostEstimate(
        flops=2 * (Np * Np * Hp + 2 * Np * Hp * Hp),
        transcendentals=0,
        bytes_accessed=Np * Np * 2 + 2 * Np * Hp * 2 + 2 * Hp * Hp * 2 + 2 * Hp * 4)
    conv_call = pl.pallas_call(
        _gin_conv_kernel,
        grid=(n_row, n_k),
        in_specs=[pl.BlockSpec((TM, TK), lambda i, k: (i, k)),   # adjacency tile
                  pl.BlockSpec((TK, Hp), lambda i, k: (k, 0)),   # previous-h K panel
                  pl.BlockSpec((Hp, Hp), lambda i, k: (0, 0)),
                  pl.BlockSpec((1, Hp), lambda i, k: (0, 0)),
                  pl.BlockSpec((Hp, Hp), lambda i, k: (0, 0)),
                  pl.BlockSpec((1, Hp), lambda i, k: (0, 0))],
        out_specs=pl.BlockSpec((TM, Hp), lambda i, k: (i, 0)),
        out_shape=jax.ShapeDtypeStruct((Np, Hp), bf16),
        scratch_shapes=[pltpu.VMEM((TM, Hp), f32)],
        compiler_params=pltpu.CompilerParams(
            dimension_semantics=("parallel", "arbitrary"),
            vmem_limit_bytes=_vmem_limit(TM * TK * 2, TK * Hp * 2,
                                         2 * Hp * Hp * 2, 2 * Hp * 4,
                                         TM * Hp * 2, TM * Hp * 4)),
        cost_estimate=conv_cost,
    )
    for l in range(nlayer):
        h = conv_call(adj_p, h, w1[l], b1[l], w2[l], b2[l])

    # ---- global_add_pool + post + readout (reduction over row panels) ----
    xp, y = pl.pallas_call(
        _pool_post_readout_kernel,
        grid=(n_row,),
        in_specs=[pl.BlockSpec((Gp, TM), lambda i: (0, i)),
                  pl.BlockSpec((TM, Hp), lambda i: (i, 0)),
                  pl.BlockSpec((Hp, Hp), lambda i: (0, 0)),
                  pl.BlockSpec((1, Hp), lambda i: (0, 0)),
                  pl.BlockSpec((Hp, Cp), lambda i: (0, 0)),
                  pl.BlockSpec((1, Cp), lambda i: (0, 0))],
        out_specs=(pl.BlockSpec((Gp, Hp), lambda i: (0, 0)),
                   pl.BlockSpec((Gp, Cp), lambda i: (0, 0))),
        out_shape=(jax.ShapeDtypeStruct((Gp, Hp), f32),
                   jax.ShapeDtypeStruct((Gp, Cp), f32)),
        compiler_params=pltpu.CompilerParams(
            dimension_semantics=("arbitrary",),
            vmem_limit_bytes=_vmem_limit(Gp * TM * 2, TM * Hp * 2, Hp * Hp * 2,
                                         Hp * 4, Hp * Cp * 2, Cp * 4,
                                         Gp * Hp * 4, Gp * Cp * 4)),
    )(pool_p, h, w_post, b_post, w_ro, b_ro)

    return xp[:G, :nhid], y[:G, :nclass]


# ----------------------------- reference & test -------------------------------


def make_params(key, nfeat, nhid, nclass, nlayer):
    ks = jax.random.split(key, 16)
    s = 0.1
    return {
        "w_pre": s * jax.random.normal(ks[0], (nfeat, nhid), jnp.float32),
        "b_pre": s * jax.random.normal(ks[1], (1, nhid), jnp.float32),
        "w1": s * jax.random.normal(ks[2], (nlayer, nhid, nhid), jnp.float32),
        "b1": s * jax.random.normal(ks[3], (nlayer, 1, nhid), jnp.float32),
        "w2": s * jax.random.normal(ks[4], (nlayer, nhid, nhid), jnp.float32),
        "b2": s * jax.random.normal(ks[5], (nlayer, 1, nhid), jnp.float32),
        "w_post": s * jax.random.normal(ks[6], (nhid, nhid), jnp.float32),
        "b_post": s * jax.random.normal(ks[7], (1, nhid), jnp.float32),
        "w_ro": s * jax.random.normal(ks[8], (nhid, nclass), jnp.float32),
        "b_ro": s * jax.random.normal(ks[9], (1, nclass), jnp.float32),
    }


def ref_forward(x, adj, pool, p):
    # Pure-JAX reference with the SAME mixed precision as the kernel
    # (bf16 matmul inputs, f32 accumulation / bias / ReLU).
    c = lambda a: a.astype(jnp.bfloat16)
    pf = jnp.float32
    adj_sl = adj + jnp.eye(adj.shape[0], dtype=adj.dtype)   # self term folded in (eps=0)
    h = jnp.dot(c(x), c(p["w_pre"]), preferred_element_type=pf) + p["b_pre"]
    for l in range(p["w1"].shape[0]):
        agg = jnp.dot(c(adj_sl), c(h), preferred_element_type=pf)
        t = jnp.maximum(jnp.dot(c(agg), c(p["w1"][l]), preferred_element_type=pf)
                        + p["b1"][l], 0.0)
        h = jnp.maximum(jnp.dot(c(t), c(p["w2"][l]), preferred_element_type=pf)
                        + p["b2"][l], 0.0)
    xp = jnp.dot(c(pool), c(h), preferred_element_type=pf)
    y = jnp.maximum(jnp.dot(c(xp), c(p["w_post"]), preferred_element_type=pf)
                    + p["b_post"], 0.0)
    y = jnp.dot(c(y), c(p["w_ro"]), preferred_element_type=pf) + p["b_ro"]
    return xp, y


if __name__ == "__main__":
    key = jax.random.PRNGKey(0)
    k_x, k_e1, k_e2, k_p = jax.random.split(key, 4)

    # Small GIN config.
    nfeat, nhid, nclass, nlayer = 8, 32, 4, 2
    N = 16            # total nodes
    G = 2             # graphs (nodes 0..7 -> graph 0, 8..15 -> graph 1)
    E_per_graph = 20

    # data.x
    x = jax.random.normal(k_x, (N, nfeat), jnp.float32)

    # data.edge_index: edges within each graph
    src0 = jax.random.randint(k_e1, (E_per_graph,), 0, 8)
    dst0 = jax.random.randint(k_e2, (E_per_graph,), 0, 8)
    src1 = jax.random.randint(k_e1, (E_per_graph,), 8, 16)
    dst1 = jax.random.randint(k_e2, (E_per_graph,), 8, 16)
    edge_index = jnp.stack([jnp.concatenate([src0, src1]),
                            jnp.concatenate([dst0, dst1])], axis=0)  # [2, 40]

    # data.batch
    batch = jnp.concatenate([jnp.zeros((8,), jnp.int32), jnp.ones((8,), jnp.int32)])

    # Glue (plain JAX): dense adjacency A[dst, src] and pooling matrix P[g, n].
    adj = jnp.zeros((N, N), jnp.float32).at[edge_index[1], edge_index[0]].add(1.0)
    pool = (batch[None, :] == jnp.arange(G, dtype=jnp.int32)[:, None]).astype(jnp.float32)

    params = make_params(k_p, nfeat, nhid, nclass, nlayer)

    x_pool, y = gin_forward(x, adj, pool, params)
    jax.block_until_ready((x_pool, y))

    x_pool_ref, y_ref = ref_forward(x, adj, pool, params)
    assert x_pool.shape == (G, nhid) and y.shape == (G, nclass)
    assert jnp.allclose(x_pool, x_pool_ref, atol=1e-2, rtol=1e-2)
    assert jnp.allclose(y, y_ref, atol=1e-2, rtol=1e-2)

    print("KERNEL_OK")
</pallas_src>

<mosaic_0001>
module attributes {stable_mosaic.version = 11 : i64} {
  func.func @_pre_kernel(%arg0: i32, %arg1: memref<256x128xbf16, #tpu.memory_space<vmem>>, %arg2: memref<128x128xbf16, #tpu.memory_space<vmem>>, %arg3: memref<1x128xf32, #tpu.memory_space<vmem>>, %arg4: memref<256x128xbf16, #tpu.memory_space<vmem>>) attributes {dimension_semantics = [#tpu.dimension_semantics<parallel>], iteration_bounds = array<i64: 1>, scalar_prefetch = 0 : i64, scratch_operands = 0 : i64, tpu.core_type = #tpu.core_type<tc>, window_params = [{transform_indices = @transform_0, window_bounds = array<i64: 256, 128>}, {pipeline_mode = #tpu.pipeline_mode<synchronous>, transform_indices = @transform_1, window_bounds = array<i64: 128, 128>}, {pipeline_mode = #tpu.pipeline_mode<synchronous>, transform_indices = @transform_2, window_bounds = array<i64: 1, 128>}, {transform_indices = @transform_3, window_bounds = array<i64: 256, 128>}]} {
    %c0 = arith.constant 0 : index
    %c0_0 = arith.constant 0 : index
    %0 = vector.load %arg1[%c0, %c0_0] : memref<256x128xbf16, #tpu.memory_space<vmem>>, vector<256x128xbf16>
    %c0_1 = arith.constant 0 : index
    %c0_2 = arith.constant 0 : index
    %1 = vector.load %arg2[%c0_1, %c0_2] : memref<128x128xbf16, #tpu.memory_space<vmem>>, vector<128x128xbf16>
    %cst = arith.constant dense<0.000000e+00> : vector<256x128xf32>
    %2 = tpu.matmul %0, %1, %cst {dimension_numbers = #tpu.dot_dimension_numbers<[1], [0], [0], [1], [0, 0, 1, 1], [], []>} : vector<256x128xbf16>, vector<128x128xbf16>, vector<256x128xf32> -> vector<256x128xf32>
    %c0_3 = arith.constant 0 : index
    %c0_4 = arith.constant 0 : index
    %3 = vector.load %arg3[%c0_3, %c0_4] : memref<1x128xf32, #tpu.memory_space<vmem>>, vector<1x128xf32>
    %4 = vector.broadcast %3 : vector<1x128xf32> to vector<256x128xf32>
    %5 = arith.addf %2, %4 : vector<256x128xf32>
    %6 = arith.truncf %5 : vector<256x128xf32> to vector<256x128xbf16>
    %c0_5 = arith.constant 0 : index
    %c0_6 = arith.constant 0 : index
    %7 = vector.load %arg4[%c0_5, %c0_6] : memref<256x128xbf16, #tpu.memory_space<vmem>>, vector<256x128xbf16>
    tpu.vector_store %arg4[%c0_5, %c0_6], %6 {strides = array<i32>} : memref<256x128xbf16, #tpu.memory_space<vmem>>, vector<256x128xbf16>,
    return
  }
  func.func @transform_0(%arg0: i32) -> (i32, i32) {
    %c0_i32 = arith.constant 0 : i32
    %c0_i32_0 = arith.constant 0 : i32
    return %arg0, %c0_i32 : i32, i32
  }
  func.func @transform_1(%arg0: i32) -> (i32, i32) {
    %c0_i32 = arith.constant 0 : i32
    %c0_i32_0 = arith.constant 0 : i32
    %c0_i32_1 = arith.constant 0 : i32
    return %c0_i32, %c0_i32_0 : i32, i32
  }
  func.func @transform_2(%arg0: i32) -> (i32, i32) {
    %c0_i32 = arith.constant 0 : i32
    %c0_i32_0 = arith.constant 0 : i32
    %c0_i32_1 = arith.constant 0 : i32
    return %c0_i32, %c0_i32_0 : i32, i32
  }
  func.func @transform_3(%arg0: i32) -> (i32, i32) {
    %c0_i32 = arith.constant 0 : i32
    %c0_i32_0 = arith.constant 0 : i32
    return %arg0, %c0_i32 : i32, i32
  }
}

module attributes {stable_mosaic.version = 11 : i64} {
  func.func @_gin_conv_kernel(%arg0: i32, %arg1: i32, %arg2: memref<256x256xbf16, #tpu.memory_space<vmem>>, %arg3: memref<256x128xbf16, #tpu.memory_space<vmem>>, %arg4: memref<128x128xbf16, #tpu.memory_space<vmem>>, %arg5: memref<1x128xf32, #tpu.memory_space<vmem>>, %arg6: memref<128x128xbf16, #tpu.memory_space<vmem>>, %arg7: memref<1x128xf32, #tpu.memory_space<vmem>>, %arg8: memref<256x128xbf16, #tpu.memory_space<vmem>>, %arg9: memref<256x128xf32, #tpu.memory_space<vmem>>) attributes {dimension_semantics = [#tpu.dimension_semantics<parallel>, #tpu.dimension_semantics<arbitrary>], iteration_bounds = array<i64: 1, 1>, scalar_prefetch = 0 : i64, scratch_operands = 1 : i64, tpu.core_type = #tpu.core_type<tc>, window_params = [{transform_indices = @transform_0, window_bounds = array<i64: 256, 256>}, {transform_indices = @transform_1, window_bounds = array<i64: 256, 128>}, {pipeline_mode = #tpu.pipeline_mode<synchronous>, transform_indices = @transform_2, window_bounds = array<i64: 128, 128>}, {pipeline_mode = #tpu.pipeline_mode<synchronous>, transform_indices = @transform_3, window_bounds = array<i64: 1, 128>}, {pipeline_mode = #tpu.pipeline_mode<synchronous>, transform_indices = @transform_4, window_bounds = array<i64: 128, 128>}, {pipeline_mode = #tpu.pipeline_mode<synchronous>, transform_indices = @transform_5, window_bounds = array<i64: 1, 128>}, {transform_indices = @transform_6, window_bounds = array<i64: 256, 128>}]} {
    %c0_i32 = arith.constant 0 : i32
    %0 = arith.cmpi eq, %arg1, %c0_i32 : i32
    %1 = arith.extui %0 : i1 to i32
    %c0_i32_0 = arith.constant 0 : i32
    %2 = arith.cmpi ne, %1, %c0_i32_0 : i32
    scf.if %2 {
      %cst_10 = arith.constant 0.000000e+00 : f32
      %12 = vector.broadcast %cst_10 : f32 to vector<256x128xf32>
      %c0_11 = arith.constant 0 : index
      %c0_12 = arith.constant 0 : index
      %13 = vector.load %arg9[%c0_11, %c0_12] : memref<256x128xf32, #tpu.memory_space<vmem>>, vector<256x128xf32>
      tpu.vector_store %arg9[%c0_11, %c0_12], %12 {strides = array<i32>} : memref<256x128xf32, #tpu.memory_space<vmem>>, vector<256x128xf32>,
    } else {
    }
    %c0 = arith.constant 0 : index
    %c0_1 = arith.constant 0 : index
    %3 = vector.load %arg9[%c0, %c0_1] : memref<256x128xf32, #tpu.memory_space<vmem>>, vector<256x128xf32>
    %c0_2 = arith.constant 0 : index
    %c0_3 = arith.constant 0 : index
    %4 = vector.load %arg2[%c0_2, %c0_3] : memref<256x256xbf16, #tpu.memory_space<vmem>>, vector<256x256xbf16>
    %c0_4 = arith.constant 0 : index
    %c0_5 = arith.constant 0 : index
    %5 = vector.load %arg3[%c0_4, %c0_5] : memref<256x128xbf16, #tpu.memory_space<vmem>>, vector<256x128xbf16>
    %cst = arith.constant dense<0.000000e+00> : vector<256x128xf32>
    %6 = tpu.matmul %4, %5, %cst {dimension_numbers = #tpu.dot_dimension_numbers<[1], [0], [0], [1], [0, 0, 1, 1], [], []>} : vector<256x256xbf16>, vector<256x128xbf16>, vector<256x128xf32> -> vector<256x128xf32>
    %7 = arith.addf %3, %6 : vector<256x128xf32>
    %c0_6 = arith.constant 0 : index
    %c0_7 = arith.constant 0 : index
    %8 = vector.load %arg9[%c0_6, %c0_7] : memref<256x128xf32, #tpu.memory_space<vmem>>, vector<256x128xf32>
    tpu.vector_store %arg9[%c0_6, %c0_7], %7 {strides = array<i32>} : memref<256x128xf32, #tpu.memory_space<vmem>>, vector<256x128xf32>,
    %c0_i32_8 = arith.constant 0 : i32
    %9 = arith.cmpi eq, %arg1, %c0_i32_8 : i32
    %10 = arith.extui %9 : i1 to i32
    %c0_i32_9 = arith.constant 0 : i32
    %11 = arith.cmpi ne, %10, %c0_i32_9 : i32
    scf.if %11 {
      %c0_10 = arith.constant 0 : index
      %c0_11 = arith.constant 0 : index
      %12 = vector.load %arg9[%c0_10, %c0_11] : memref<256x128xf32, #tpu.memory_space<vmem>>, vector<256x128xf32>
      %13 = arith.truncf %12 : vector<256x128xf32> to vector<256x128xbf16>
      %c0_12 = arith.constant 0 : index
      %c0_13 = arith.constant 0 : index
      %14 = vector.load %arg4[%c0_12, %c0_13] : memref<128x128xbf16, #tpu.memory_space<vmem>>, vector<128x128xbf16>
      %cst_14 = arith.constant dense<0.000000e+00> : vector<256x128xf32>
      %15 = tpu.matmul %13, %14, %cst_14 {dimension_numbers = #tpu.dot_dimension_numbers<[1], [0], [0], [1], [0, 0, 1, 1], [], []>} : vector<256x128xbf16>, vector<128x128xbf16>, vector<256x128xf32> -> vector<256x128xf32>
      %c0_15 = arith.constant 0 : index
      %c0_16 = arith.constant 0 : index
      %16 = vector.load %arg5[%c0_15, %c0_16] : memref<1x128xf32, #tpu.memory_space<vmem>>, vector<1x128xf32>
      %17 = vector.broadcast %16 : vector<1x128xf32> to vector<256x128xf32>
      %18 = arith.addf %15, %17 : vector<256x128xf32>
      %cst_17 = arith.constant 0.000000e+00 : f32
      %19 = vector.broadcast %cst_17 : f32 to vector<256x128xf32>
      %20 = arith.maximumf %18, %19 : vector<256x128xf32>
      %21 = arith.truncf %20 : vector<256x128xf32> to vector<256x128xbf16>
      %c0_18 = arith.constant 0 : index
      %c0_19 = arith.constant 0 : index
      %22 = vector.load %arg6[%c0_18, %c0_19] : memref<128x128xbf16, #tpu.memory_space<vmem>>, vector<128x128xbf16>
      %cst_20 = arith.constant dense<0.000000e+00> : vector<256x128xf32>
      %23 = tpu.matmul %21, %22, %cst_20 {dimension_numbers = #tpu.dot_dimension_numbers<[1], [0], [0], [1], [0, 0, 1, 1], [], []>} : vector<256x128xbf16>, vector<128x128xbf16>, vector<256x128xf32> -> vector<256x128xf32>
      %c0_21 = arith.constant 0 : index
      %c0_22 = arith.constant 0 : index
      %24 = vector.load %arg7[%c0_21, %c0_22] : memref<1x128xf32, #tpu.memory_space<vmem>>, vector<1x128xf32>
      %25 = vector.broadcast %24 : vector<1x128xf32> to vector<256x128xf32>
      %26 = arith.addf %23, %25 : vector<256x128xf32>
      %cst_23 = arith.constant 0.000000e+00 : f32
      %27 = vector.broadcast %cst_23 : f32 to vector<256x128xf32>
      %28 = arith.maximumf %26, %27 : vector<256x128xf32>
      %29 = arith.truncf %28 : vector<256x128xf32> to vector<256x128xbf16>
      %c0_24 = arith.constant 0 : index
      %c0_25 = arith.constant 0 : index
      %30 = vector.load %arg8[%c0_24, %c0_25] : memref<256x128xbf16, #tpu.memory_space<vmem>>, vector<256x128xbf16>
      tpu.vector_store %arg8[%c0_24, %c0_25], %29 {strides = array<i32>} : memref<256x128xbf16, #tpu.memory_space<vmem>>, vector<256x128xbf16>,
    } else {
    }
    return
  }
  func.func @transform_0(%arg0: i32, %arg1: i32) -> (i32, i32) {
    %c0_i32 = arith.constant 0 : i32
    return %arg0, %arg1 : i32, i32
  }
  func.func @transform_1(%arg0: i32, %arg1: i32) -> (i32, i32) {
    %c0_i32 = arith.constant 0 : i32
    %c0_i32_0 = arith.constant 0 : i32
    return %arg1, %c0_i32 : i32, i32
  }
  func.func @transform_2(%arg0: i32, %arg1: i32) -> (i32, i32) {
    %c0_i32 = arith.constant 0 : i32
    %c0_i32_0 = arith.constant 0 : i32
    %c0_i32_1 = arith.constant 0 : i32
    return %c0_i32, %c0_i32_0 : i32, i32
  }
  func.func @transform_3(%arg0: i32, %arg1: i32) -> (i32, i32) {
    %c0_i32 = arith.constant 0 : i32
    %c0_i32_0 = arith.constant 0 : i32
    %c0_i32_1 = arith.constant 0 : i32
    return %c0_i32, %c0_i32_0 : i32, i32
  }
  func.func @transform_4(%arg0: i32, %arg1: i32) -> (i32, i32) {
    %c0_i32 = arith.constant 0 : i32
    %c0_i32_0 = arith.constant 0 : i32
    %c0_i32_1 = arith.constant 0 : i32
    return %c0_i32, %c0_i32_0 : i32, i32
  }
  func.func @transform_5(%arg0: i32, %arg1: i32) -> (i32, i32) {
    %c0_i32 = arith.constant 0 : i32
    %c0_i32_0 = arith.constant 0 : i32
    %c0_i32_1 = arith.constant 0 : i32
    return %c0_i32, %c0_i32_0 : i32, i32
  }
  func.func @transform_6(%arg0: i32, %arg1: i32) -> (i32, i32) {
    %c0_i32 = arith.constant 0 : i32
    %c0_i32_0 = arith.constant 0 : i32
    return %arg0, %c0_i32 : i32, i32
  }
}

module attributes {stable_mosaic.version = 11 : i64} {
  func.func @_pool_post_readout_kernel(%arg0: i32, %arg1: memref<16x256xbf16, #tpu.memory_space<vmem>>, %arg2: memref<256x128xbf16, #tpu.memory_space<vmem>>, %arg3: memref<128x128xbf16, #tpu.memory_space<vmem>>, %arg4: memref<1x128xf32, #tpu.memory_space<vmem>>, %arg5: memref<128x128xbf16, #tpu.memory_space<vmem>>, %arg6: memref<1x128xf32, #tpu.memory_space<vmem>>, %arg7: memref<16x128xf32, #tpu.memory_space<vmem>>, %arg8: memref<16x128xf32, #tpu.memory_space<vmem>>) attributes {dimension_semantics = [#tpu.dimension_semantics<arbitrary>], iteration_bounds = array<i64: 1>, scalar_prefetch = 0 : i64, scratch_operands = 0 : i64, tpu.core_type = #tpu.core_type<tc>, window_params = [{transform_indices = @transform_0, window_bounds = array<i64: 16, 256>}, {transform_indices = @transform_1, window_bounds = array<i64: 256, 128>}, {pipeline_mode = #tpu.pipeline_mode<synchronous>, transform_indices = @transform_2, window_bounds = array<i64: 128, 128>}, {pipeline_mode = #tpu.pipeline_mode<synchronous>, transform_indices = @transform_3, window_bounds = array<i64: 1, 128>}, {pipeline_mode = #tpu.pipeline_mode<synchronous>, transform_indices = @transform_4, window_bounds = array<i64: 128, 128>}, {pipeline_mode = #tpu.pipeline_mode<synchronous>, transform_indices = @transform_5, window_bounds = array<i64: 1, 128>}, {pipeline_mode = #tpu.pipeline_mode<synchronous>, transform_indices = @transform_6, window_bounds = array<i64: 16, 128>}, {pipeline_mode = #tpu.pipeline_mode<synchronous>, transform_indices = @transform_7, window_bounds = array<i64: 16, 128>}]} {
    %c0_i32 = arith.constant 0 : i32
    %0 = arith.cmpi eq, %arg0, %c0_i32 : i32
    %1 = arith.extui %0 : i1 to i32
    %c0_i32_0 = arith.constant 0 : i32
    %2 = arith.cmpi ne, %1, %c0_i32_0 : i32
    scf.if %2 {
      %cst_10 = arith.constant 0.000000e+00 : f32
      %12 = vector.broadcast %cst_10 : f32 to vector<16x128xf32>
      %c0_11 = arith.constant 0 : index
      %c0_12 = arith.constant 0 : index
      %13 = vector.load %arg7[%c0_11, %c0_12] : memref<16x128xf32, #tpu.memory_space<vmem>>, vector<16x128xf32>
      tpu.vector_store %arg7[%c0_11, %c0_12], %12 {strides = array<i32>} : memref<16x128xf32, #tpu.memory_space<vmem>>, vector<16x128xf32>,
    } else {
    }
    %c0 = arith.constant 0 : index
    %c0_1 = arith.constant 0 : index
    %3 = vector.load %arg7[%c0, %c0_1] : memref<16x128xf32, #tpu.memory_space<vmem>>, vector<16x128xf32>
    %c0_2 = arith.constant 0 : index
    %c0_3 = arith.constant 0 : index
    %4 = vector.load %arg1[%c0_2, %c0_3] : memref<16x256xbf16, #tpu.memory_space<vmem>>, vector<16x256xbf16>
    %c0_4 = arith.constant 0 : index
    %c0_5 = arith.constant 0 : index
    %5 = vector.load %arg2[%c0_4, %c0_5] : memref<256x128xbf16, #tpu.memory_space<vmem>>, vector<256x128xbf16>
    %cst = arith.constant dense<0.000000e+00> : vector<16x128xf32>
    %6 = tpu.matmul %4, %5, %cst {dimension_numbers = #tpu.dot_dimension_numbers<[1], [0], [0], [1], [0, 0, 1, 1], [], []>} : vector<16x256xbf16>, vector<256x128xbf16>, vector<16x128xf32> -> vector<16x128xf32>
    %7 = arith.addf %3, %6 : vector<16x128xf32>
    %c0_6 = arith.constant 0 : index
    %c0_7 = arith.constant 0 : index
    %8 = vector.load %arg7[%c0_6, %c0_7] : memref<16x128xf32, #tpu.memory_space<vmem>>, vector<16x128xf32>
    tpu.vector_store %arg7[%c0_6, %c0_7], %7 {strides = array<i32>} : memref<16x128xf32, #tpu.memory_space<vmem>>, vector<16x128xf32>,
    %c0_i32_8 = arith.constant 0 : i32
    %9 = arith.cmpi eq, %arg0, %c0_i32_8 : i32
    %10 = arith.extui %9 : i1 to i32
    %c0_i32_9 = arith.constant 0 : i32
    %11 = arith.cmpi ne, %10, %c0_i32_9 : i32
    scf.if %11 {
      %c0_10 = arith.constant 0 : index
      %c0_11 = arith.constant 0 : index
      %12 = vector.load %arg7[%c0_10, %c0_11] : memref<16x128xf32, #tpu.memory_space<vmem>>, vector<16x128xf32>
      %13 = arith.truncf %12 : vector<16x128xf32> to vector<16x128xbf16>
      %c0_12 = arith.constant 0 : index
      %c0_13 = arith.constant 0 : index
      %14 = vector.load %arg3[%c0_12, %c0_13] : memref<128x128xbf16, #tpu.memory_space<vmem>>, vector<128x128xbf16>
      %cst_14 = arith.constant dense<0.000000e+00> : vector<16x128xf32>
      %15 = tpu.matmul %13, %14, %cst_14 {dimension_numbers = #tpu.dot_dimension_numbers<[1], [0], [0], [1], [0, 0, 1, 1], [], []>} : vector<16x128xbf16>, vector<128x128xbf16>, vector<16x128xf32> -> vector<16x128xf32>
      %c0_15 = arith.constant 0 : index
      %c0_16 = arith.constant 0 : index
      %16 = vector.load %arg4[%c0_15, %c0_16] : memref<1x128xf32, #tpu.memory_space<vmem>>, vector<1x128xf32>
      %17 = vector.broadcast %16 : vector<1x128xf32> to vector<16x128xf32>
      %18 = arith.addf %15, %17 : vector<16x128xf32>
      %cst_17 = arith.constant 0.000000e+00 : f32
      %19 = vector.broadcast %cst_17 : f32 to vector<16x128xf32>
      %20 = arith.maximumf %18, %19 : vector<16x128xf32>
      %21 = arith.truncf %20 : vector<16x128xf32> to vector<16x128xbf16>
      %c0_18 = arith.constant 0 : index
      %c0_19 = arith.constant 0 : index
      %22 = vector.load %arg5[%c0_18, %c0_19] : memref<128x128xbf16, #tpu.memory_space<vmem>>, vector<128x128xbf16>
      %cst_20 = arith.constant dense<0.000000e+00> : vector<16x128xf32>
      %23 = tpu.matmul %21, %22, %cst_20 {dimension_numbers = #tpu.dot_dimension_numbers<[1], [0], [0], [1], [0, 0, 1, 1], [], []>} : vector<16x128xbf16>, vector<128x128xbf16>, vector<16x128xf32> -> vector<16x128xf32>
      %c0_21 = arith.constant 0 : index
      %c0_22 = arith.constant 0 : index
      %24 = vector.load %arg6[%c0_21, %c0_22] : memref<1x128xf32, #tpu.memory_space<vmem>>, vector<1x128xf32>
      %25 = vector.broadcast %24 : vector<1x128xf32> to vector<16x128xf32>
      %26 = arith.addf %23, %25 : vector<16x128xf32>
      %c0_23 = arith.constant 0 : index
      %c0_24 = arith.constant 0 : index
      %27 = vector.load %arg8[%c0_23, %c0_24] : memref<16x128xf32, #tpu.memory_space<vmem>>, vector<16x128xf32>
      tpu.vector_store %arg8[%c0_23, %c0_24], %26 {strides = array<i32>} : memref<16x128xf32, #tpu.memory_space<vmem>>, vector<16x128xf32>,
    } else {
    }
    return
  }
  func.func @transform_0(%arg0: i32) -> (i32, i32) {
    %c0_i32 = arith.constant 0 : i32
    %c0_i32_0 = arith.constant 0 : i32
    return %c0_i32, %arg0 : i32, i32
  }
  func.func @transform_1(%arg0: i32) -> (i32, i32) {
    %c0_i32 = arith.constant 0 : i32
    %c0_i32_0 = arith.constant 0 : i32
    return %arg0, %c0_i32 : i32, i32
  }
  func.func @transform_2(%arg0: i32) -> (i32, i32) {
    %c0_i32 = arith.constant 0 : i32
    %c0_i32_0 = arith.constant 0 : i32
    %c0_i32_1 = arith.constant 0 : i32
    return %c0_i32, %c0_i32_0 : i32, i32
  }
  func.func @transform_3(%arg0: i32) -> (i32, i32) {
    %c0_i32 = arith.constant 0 : i32
    %c0_i32_0 = arith.constant 0 : i32
    %c0_i32_1 = arith.constant 0 : i32
    return %c0_i32, %c0_i32_0 : i32, i32
  }
  func.func @transform_4(%arg0: i32) -> (i32, i32) {
    %c0_i32 = arith.constant 0 : i32
    %c0_i32_0 = arith.constant 0 : i32
    %c0_i32_1 = arith.constant 0 : i32
    return %c0_i32, %c0_i32_0 : i32, i32
  }
  func.func @transform_5(%arg0: i32) -> (i32, i32) {
    %c0_i32 = arith.constant 0 : i32
    %c0_i32_0 = arith.constant 0 : i32
    %c0_i32_1 = arith.constant 0 : i32
    return %c0_i32, %c0_i32_0 : i32, i32
  }
  func.func @transform_6(%arg0: i32) -> (i32, i32) {
    %c0_i32 = arith.constant 0 : i32
    %c0_i32_0 = arith.constant 0 : i32
    %c0_i32_1 = arith.constant 0 : i32
    return %c0_i32, %c0_i32_0 : i32, i32
  }
  func.func @transform_7(%arg0: i32) -> (i32, i32) {
    %c0_i32 = arith.constant 0 : i32
    %c0_i32_0 = arith.constant 0 : i32
    %c0_i32_1 = arith.constant 0 : i32
    return %c0_i32, %c0_i32_0 : i32, i32
  }
}

</mosaic_0001>

<llo_original>
// kernel: gin_forward.4
$region0: #{gin_forward.4}
  #allocation0 [shape = 'u32[]', space=smem, size = 0x4, offset = 0x4, fixed_abs, tag = 'smem constant byte address 0x4 - core index']
  #allocation1 [shape = 'u32[144,128]{1,0:T(1,128)}', space=vmem, size = 0x12000, scoped, tag = 'internal scratch']
  %s0 = inlined_call_operand.vmem [shape: bf16[256,128], index: 0, kind: input, shape index: {}]
  %s1 = inlined_call_operand.vmem [shape: bf16[128,128], index: 1, kind: input, shape index: {}]
  %s2 = inlined_call_operand.vmem [shape: f32[1,128], index: 2, kind: input, shape index: {}]
  %s3 = inlined_call_operand.vmem [shape: bf16[256,128], index: 3, kind: output, shape index: {}]
  %s4 = sld [smem:[#allocation0]]
  $region22: #{gin_forward.4} parent=0
    _
  %s6 = ssub.s32 1, %s4
  %s7 = scalar_select 0, %s6, %s4
  // Predicated region
  $region2: #{gin_forward.4} parent=0 // pred_check
    _
  $region3: #{gin_forward.4} parent=0 // pred_check_branch
    %9 = sbr.rel (0) target = $region5
  $region4: #{gin_forward.4} parent=0 // pred_region
    _
  $region5: #{gin_forward.4} parent=0 // pred_fallthru
    _
  // Predicated region
  $region6: #{gin_forward.4} parent=0 // pred_check
    _
  $region7: #{gin_forward.4} parent=0 // pred_check_branch
    %11 = sbr.rel (0) target = $region9
  $region8: #{gin_forward.4} parent=0 // pred_region
    _
  $region9: #{gin_forward.4} parent=0 // pred_fallthru
    _
  // Predicated region
  $region10: #{gin_forward.4} parent=0 // pred_check
    _
  $region11: #{gin_forward.4} parent=0 // pred_check_branch
    %13 = sbr.rel (0) target = $region13
  $region12: #{gin_forward.4} parent=0 // pred_region
    _
  $region13: #{gin_forward.4} parent=0 // pred_fallthru
    _
  %v15 = vld [vmem:[%s0] sm:$0xf]
  %v16 = vld [vmem:[%s0 + $0x4] sm:$0xf]
  %v17 = vld [vmem:[%s0 + $0x8] sm:$0xf]
  %v18 = vld [vmem:[%s0 + $0xc] sm:$0xf]
  %v19 = vld [vmem:[%s0 + $0x10] sm:$0xf]
  %v20 = vld [vmem:[%s0 + $0x14] sm:$0xf]
  %v21 = vld [vmem:[%s0 + $0x18] sm:$0xf]
  %v22 = vld [vmem:[%s0 + $0x1c] sm:$0xf]
  %v23 = vld [vmem:[%s0 + $0x20] sm:$0xf]
  %v24 = vld [vmem:[%s0 + $0x24] sm:$0xf]
  %v25 = vld [vmem:[%s0 + $0x28] sm:$0xf]
  %v26 = vld [vmem:[%s0 + $0x2c] sm:$0xf]
  %v27 = vld [vmem:[%s0 + $0x30] sm:$0xf]
  %v28 = vld [vmem:[%s0 + $0x34] sm:$0xf]
  %v29 = vld [vmem:[%s0 + $0x38] sm:$0xf]
  %v30 = vld [vmem:[%s0 + $0x3c] sm:$0xf]
  %v31 = vld [vmem:[%s0 + $0x40] sm:$0xf]
  %v32 = vld [vmem:[%s0 + $0x44] sm:$0xf]
  %v33 = vld [vmem:[%s0 + $0x48] sm:$0xf]
  %v34 = vld [vmem:[%s0 + $0x4c] sm:$0xf]
  %v35 = vld [vmem:[%s0 + $0x50] sm:$0xf]
  %v36 = vld [vmem:[%s0 + $0x54] sm:$0xf]
  %v37 = vld [vmem:[%s0 + $0x58] sm:$0xf]
  %v38 = vld [vmem:[%s0 + $0x5c] sm:$0xf]
  %v39 = vld [vmem:[%s0 + $0x60] sm:$0xf]
  %v40 = vld [vmem:[%s0 + $0x64] sm:$0xf]
  %v41 = vld [vmem:[%s0 + $0x68] sm:$0xf]
  %v42 = vld [vmem:[%s0 + $0x6c] sm:$0xf]
  %v43 = vld [vmem:[%s0 + $0x70] sm:$0xf]
  %v44 = vld [vmem:[%s0 + $0x74] sm:$0xf]
  %v45 = vld [vmem:[%s0 + $0x78] sm:$0xf]
  %v46 = vld [vmem:[%s0 + $0x7c] sm:$0xf]
  %v47 = vld [vmem:[%s1] sm:$0xf]
  %v48 = vld [vmem:[%s1 + $0x4] sm:$0xf]
  %v49 = vld [vmem:[%s1 + $0x8] sm:$0xf]
  %v50 = vld [vmem:[%s1 + $0xc] sm:$0xf]
  %v51 = vld [vmem:[%s1 + $0x10] sm:$0xf]
  %v52 = vld [vmem:[%s1 + $0x14] sm:$0xf]
  %v53 = vld [vmem:[%s1 + $0x18] sm:$0xf]
  %v54 = vld [vmem:[%s1 + $0x1c] sm:$0xf]
  %v55 = vld [vmem:[%s1 + $0x20] sm:$0xf]
  %v56 = vld [vmem:[%s1 + $0x24] sm:$0xf]
  %v57 = vld [vmem:[%s1 + $0x28] sm:$0xf]
  %v58 = vld [vmem:[%s1 + $0x2c] sm:$0xf]
  %v59 = vld [vmem:[%s1 + $0x30] sm:$0xf]
  %v60 = vld [vmem:[%s1 + $0x34] sm:$0xf]
  %v61 = vld [vmem:[%s1 + $0x38] sm:$0xf]
  %v62 = vld [vmem:[%s1 + $0x3c] sm:$0xf]
  %v63 = vld [vmem:[%s2] sm:$0x1]
  %v65 = vlaneseq
  %v66 = vshrl.u32 %v65, 7
  %v67 = vsub.s32 0, %v66
  %v68 = vrot.slane %v63, %v67
  %v102 = vunpack.c.l.b16 %v15
  %v103 = vunpack.c.l.b16 %v16
  %v104 = vunpack.c.l.b16 %v17
  %v105 = vunpack.c.l.b16 %v18
  %v106 = vunpack.c.l.b16 %v19
  %v107 = vunpack.c.l.b16 %v20
  %v108 = vunpack.c.l.b16 %v21
  %v109 = vunpack.c.l.b16 %v22
  %v110 = vunpack.c.l.b16 %v23
  %v111 = vunpack.c.l.b16 %v24
  %v112 = vunpack.c.l.b16 %v25
  %v113 = vunpack.c.l.b16 %v26
  %v114 = vunpack.c.l.b16 %v27
  %v115 = vunpack.c.l.b16 %v28
  %v116 = vunpack.c.l.b16 %v29
  %v117 = vunpack.c.l.b16 %v30
  %v118 = vunpack.c.l.b16 %v31
  %v119 = vunpack.c.l.b16 %v32
  %v120 = vunpack.c.l.b16 %v33
  %v121 = vunpack.c.l.b16 %v34
  %v122 = vunpack.c.l.b16 %v35
  %v123 = vunpack.c.l.b16 %v36
  %v124 = vunpack.c.l.b16 %v37
  %v125 = vunpack.c.l.b16 %v38
  %v126 = vunpack.c.l.b16 %v39
  %v127 = vunpack.c.l.b16 %v40
  %v128 = vunpack.c.l.b16 %v41
  %v129 = vunpack.c.l.b16 %v42
  %v130 = vunpack.c.l.b16 %v43
  %v131 = vunpack.c.l.b16 %v44
  %v132 = vunpack.c.l.b16 %v45
  %v133 = vunpack.c.l.b16 %v46
  %v134 = vpack.c.b16 %v103, %v102
  %v135 = vpack.c.b16 %v105, %v104
  %v136 = vpack.c.b16 %v107, %v106
  %v137 = vpack.c.b16 %v109, %v108
  %v138 = vpack.c.b16 %v111, %v110
  %v139 = vpack.c.b16 %v113, %v112
  %v140 = vpack.c.b16 %v115, %v114
  %v141 = vpack.c.b16 %v117, %v116
  %v142 = vpack.c.b16 %v119, %v118
  %v143 = vpack.c.b16 %v121, %v120
  %v144 = vpack.c.b16 %v123, %v122
  %v145 = vpack.c.b16 %v125, %v124
  %v146 = vpack.c.b16 %v127, %v126
  %v147 = vpack.c.b16 %v129, %v128
  %v148 = vpack.c.b16 %v131, %v130
  %v149 = vpack.c.b16 %v133, %v132
  %v182 = vunpack.c.l.b16 %v47
  %v183 = vunpack.c.l.b16 %v48
  %v184 = vunpack.c.l.b16 %v49
  %v185 = vunpack.c.l.b16 %v50
  %v186 = vunpack.c.l.b16 %v51
  %v187 = vunpack.c.l.b16 %v52
  %v188 = vunpack.c.l.b16 %v53
  %v189 = vunpack.c.l.b16 %v54
  %v190 = vunpack.c.l.b16 %v55
  %v191 = vunpack.c.l.b16 %v56
  %v192 = vunpack.c.l.b16 %v57
  %v193 = vunpack.c.l.b16 %v58
  %v194 = vunpack.c.l.b16 %v59
  %v195 = vunpack.c.l.b16 %v60
  %v196 = vunpack.c.l.b16 %v61
  %v197 = vunpack.c.l.b16 %v62
  %v198 = vpack.c.b16 %v183, %v182
  %v199 = vpack.c.b16 %v185, %v184
  %v200 = vpack.c.b16 %v187, %v186
  %v201 = vpack.c.b16 %v189, %v188
  %v202 = vpack.c.b16 %v191, %v190
  %v203 = vpack.c.b16 %v193, %v192
  %v204 = vpack.c.b16 %v195, %v194
  %v205 = vpack.c.b16 %v197, %v196
  %214 = vmatprep.subr.bf16.mxu0 0
  %215 = vmatpush1.bf16.msra.mxu0 %v198
  %216 = vmatprep.subr.bf16.mxu0 0
  %217 = vmatpush1.bf16.msra.mxu0 %v199
  %218 = vmatprep.subr.bf16.mxu0 0
  %219 = vmatpush1.bf16.msra.mxu0 %v200
  %220 = vmatprep.subr.bf16.mxu0 0
  %221 = vmatpush1.bf16.msra.mxu0 %v201
  %222 = vmatprep.subr.bf16.mxu0 0
  %223 = vmatpush1.bf16.msra.mxu0 %v202
  %224 = vmatprep.subr.bf16.mxu0 0
  %225 = vmatpush1.bf16.msra.mxu0 %v203
  %226 = vmatprep.subr.bf16.mxu0 0
  %227 = vmatpush1.bf16.msra.mxu0 %v204
  %228 = vmatprep.subr.bf16.mxu0 0
  %229 = vmatpush1.bf16.msra.mxu0 %v205
  %230 = vmatprep.subr.bf16.mxu0 0
  %231 = vmatpush1.bf16.msra.mxu0 0
  %232 = vmatprep.subr.bf16.mxu0 0
  %233 = vmatpush1.bf16.msra.mxu0 0
  %234 = vmatprep.subr.bf16.mxu0 0
  %235 = vmatpush1.bf16.msra.mxu0 0
  %236 = vmatprep.subr.bf16.mxu0 0
  %237 = vmatpush1.bf16.msra.mxu0 0
  %238 = vmatprep.subr.bf16.mxu0 0
  %239 = vmatpush1.bf16.msra.mxu0 0
  %240 = vmatprep.subr.bf16.mxu0 0
  %241 = vmatpush1.bf16.msra.mxu0 0
  %242 = vmatprep.subr.bf16.mxu0 0
  %243 = vmatpush1.bf16.msra.mxu0 0
  %244 = vmatprep.subr.bf16.mxu0 0
  %245 = vmatpush1.bf16.msra.mxu0 0
  %246 = vmatprep.mubr.bf16.mxu0 0
  %247 = vmatmul.mubr.bf16.gmra.mrb[0].mxu0 %v134
  %v248 = vpop.f32.mrb[0].mxu0
  %v249 = vadd.f32 %v68, %v248
  %v250 = vpop.f32.mrb[0].mxu0
  %v251 = vpop.f32.mrb[0].mxu0
  %v252 = vadd.f32 %v68, %v251
  %v253 = vpop.f32.mrb[0].mxu0
  %254 = vmatprep.mubr.bf16.mxu0 0
  %255 = vmatmul.mubr.bf16.gmra.mrb[0].mxu0 %v135
  %v256 = vpop.f32.mrb[0].mxu0
  %v257 = vadd.f32 %v68, %v256
  %v258 = vpop.f32.mrb[0].mxu0
  %v259 = vpop.f32.mrb[0].mxu0
  %v260 = vadd.f32 %v68, %v259
  %v261 = vpop.f32.mrb[0].mxu0
  %262 = vmatprep.mubr.bf16.mxu0 0
  %263 = vmatmul.mubr.bf16.gmra.mrb[0].mxu0 %v136
  %v264 = vpop.f32.mrb[0].mxu0
  %v265 = vadd.f32 %v68, %v264
  %v266 = vpop.f32.mrb[0].mxu0
  %v267 = vpop.f32.mrb[0].mxu0
  %v268 = vadd.f32 %v68, %v267
  %v269 = vpop.f32.mrb[0].mxu0
  %270 = vmatprep.mubr.bf16.mxu0 0
  %271 = vmatmul.mubr.bf16.gmra.mrb[0].mxu0 %v137
  %v272 = vpop.f32.mrb[0].mxu0
  %v273 = vadd.f32 %v68, %v272
  %v274 = vpop.f32.mrb[0].mxu0
  %v275 = vpop.f32.mrb[0].mxu0
  %v276 = vadd.f32 %v68, %v275
  %v277 = vpop.f32.mrb[0].mxu0
  %278 = vmatprep.mubr.bf16.mxu0 0
  %279 = vmatmul.mubr.bf16.gmra.mrb[0].mxu0 %v138
  %v280 = vpop.f32.mrb[0].mxu0
  %v281 = vadd.f32 %v68, %v280
  %v282 = vpop.f32.mrb[0].mxu0
  %v283 = vpop.f32.mrb[0].mxu0
  %v284 = vadd.f32 %v68, %v283
  %v285 = vpop.f32.mrb[0].mxu0
  %286 = vmatprep.mubr.bf16.mxu0 0
  %287 = vmatmul.mubr.bf16.gmra.mrb[0].mxu0 %v139
  %v288 = vpop.f32.mrb[0].mxu0
  %v289 = vadd.f32 %v68, %v288
  %v290 = vpop.f32.mrb[0].mxu0
  %v291 = vpop.f32.mrb[0].mxu0
  %v292 = vadd.f32 %v68, %v291
  %v293 = vpop.f32.mrb[0].mxu0
  %294 = vmatprep.mubr.bf16.mxu0 0
  %295 = vmatmul.mubr.bf16.gmra.mrb[0].mxu0 %v140
  %v296 = vpop.f32.mrb[0].mxu0
  %v297 = vadd.f32 %v68, %v296
  %v298 = vpop.f32.mrb[0].mxu0
  %v299 = vpop.f32.mrb[0].mxu0
  %v300 = vadd.f32 %v68, %v299
  %v301 = vpop.f32.mrb[0].mxu0
  %302 = vmatprep.mubr.bf16.mxu0 0
  %303 = vmatmul.mubr.bf16.gmra.mrb[0].mxu0 %v141
  %v304 = vpop.f32.mrb[0].mxu0
  %v305 = vadd.f32 %v68, %v304
  %v306 = vpop.f32.mrb[0].mxu0
  %v307 = vpop.f32.mrb[0].mxu0
  %v308 = vadd.f32 %v68, %v307
  %v309 = vpop.f32.mrb[0].mxu0
  %310 = vmatprep.mubr.bf16.mxu0 0
  %311 = vmatmul.mubr.bf16.gmra.mrb[0].mxu0 %v142
  %v312 = vpop.f32.mrb[0].mxu0
  %v313 = vadd.f32 %v68, %v312
  %v314 = vpop.f32.mrb[0].mxu0
  %v315 = vpop.f32.mrb[0].mxu0
  %v316 = vadd.f32 %v68, %v315
  %v317 = vpop.f32.mrb[0].mxu0
  %318 = vmatprep.mubr.bf16.mxu0 0
  %319 = vmatmul.mubr.bf16.gmra.mrb[0].mxu0 %v143
  %v320 = vpop.f32.mrb[0].mxu0
  %v321 = vadd.f32 %v68, %v320
  %v322 = vpop.f32.mrb[0].mxu0
  %v323 = vpop.f32.mrb[0].mxu0
  %v324 = vadd.f32 %v68, %v323
  %v325 = vpop.f32.mrb[0].mxu0
  %326 = vmatprep.mubr.bf16.mxu0 0
  %327 = vmatmul.mubr.bf16.gmra.mrb[0].mxu0 %v144
  %v328 = vpop.f32.mrb[0].mxu0
  %v329 = vadd.f32 %v68, %v328
  %v330 = vpop.f32.mrb[0].mxu0
  %v331 = vpop.f32.mrb[0].mxu0
  %v332 = vadd.f32 %v68, %v331
  %v333 = vpop.f32.mrb[0].mxu0
  %334 = vmatprep.mubr.bf16.mxu0 0
  %335 = vmatmul.mubr.bf16.gmra.mrb[0].mxu0 %v145
  %v336 = vpop.f32.mrb[0].mxu0
  %v337 = vadd.f32 %v68, %v336
  %v338 = vpop.f32.mrb[0].mxu0
  %v339 = vpop.f32.mrb[0].mxu0
  %v340 = vadd.f32 %v68, %v339
  %v341 = vpop.f32.mrb[0].mxu0
  %342 = vmatprep.mubr.bf16.mxu0 0
  %343 = vmatmul.mubr.bf16.gmra.mrb[0].mxu0 %v146
  %v344 = vpop.f32.mrb[0].mxu0
  %v345 = vadd.f32 %v68, %v344
  %v346 = vpop.f32.mrb[0].mxu0
  %v347 = vpop.f32.mrb[0].mxu0
  %v348 = vadd.f32 %v68, %v347
  %v349 = vpop.f32.mrb[0].mxu0
  %350 = vmatprep.mubr.bf16.mxu0 0
  %351 = vmatmul.mubr.bf16.gmra.mrb[0].mxu0 %v147
  %v352 = vpop.f32.mrb[0].mxu0
  %v353 = vadd.f32 %v68, %v352
  %v354 = vpop.f32.mrb[0].mxu0
  %v355 = vpop.f32.mrb[0].mxu0
  %v356 = vadd.f32 %v68, %v355
  %v357 = vpop.f32.mrb[0].mxu0
  %358 = vmatprep.mubr.bf16.mxu0 0
  %359 = vmatmul.mubr.bf16.gmra.mrb[0].mxu0 %v148
  %v360 = vpop.f32.mrb[0].mxu0
  %v361 = vadd.f32 %v68, %v360
  %v362 = vpop.f32.mrb[0].mxu0
  %v363 = vpop.f32.mrb[0].mxu0
  %v364 = vadd.f32 %v68, %v363
  %v365 = vpop.f32.mrb[0].mxu0
  %366 = vmatprep.mubr.bf16.mxu0 0
  %367 = vmatmul.mubr.bf16.gmra.mrb[0].mxu0 %v149
  %v368 = vpop.f32.mrb[0].mxu0
  %v369 = vadd.f32 %v68, %v368
  %v370 = vpop.f32.mrb[0].mxu0
  %v371 = vpop.f32.mrb[0].mxu0
  %v372 = vadd.f32 %v68, %v371
  %v373 = vpop.f32.mrb[0].mxu0
  %374 = vdwg.mxu0
  %v375 = vpack.c.bf16 %v252, %v249
  %v376 = vpack.c.bf16 %v260, %v257
  %v377 = vpack.c.bf16 %v268, %v265
  %v378 = vpack.c.bf16 %v276, %v273
  %v379 = vpack.c.bf16 %v284, %v281
  %v380 = vpack.c.bf16 %v292, %v289
  %v381 = vpack.c.bf16 %v300, %v297
  %v382 = vpack.c.bf16 %v308, %v305
  %v383 = vpack.c.bf16 %v316, %v313
  %v384 = vpack.c.bf16 %v324, %v321
  %v385 = vpack.c.bf16 %v332, %v329
  %v386 = vpack.c.bf16 %v340, %v337
  %v387 = vpack.c.bf16 %v348, %v345
  %v388 = vpack.c.bf16 %v356, %v353
  %v389 = vpack.c.bf16 %v364, %v361
  %v390 = vpack.c.bf16 %v372, %v369
  %v407 = vunpack.c.l.b16 %v375
  %v408 = vunpack.c.h.b16 %v375
  %v409 = vunpack.c.l.b16 %v376
  %v410 = vunpack.c.h.b16 %v376
  %v411 = vunpack.c.l.b16 %v377
  %v412 = vunpack.c.h.b16 %v377
  %v413 = vunpack.c.l.b16 %v378
  %v414 = vunpack.c.h.b16 %v378
  %v415 = vunpack.c.l.b16 %v379
  %v416 = vunpack.c.h.b16 %v379
  %v417 = vunpack.c.l.b16 %v380
  %v418 = vunpack.c.h.b16 %v380
  %v419 = vunpack.c.l.b16 %v381
  %v420 = vunpack.c.h.b16 %v381
  %v421 = vunpack.c.l.b16 %v382
  %v422 = vunpack.c.h.b16 %v382
  %v423 = vunpack.c.l.b16 %v383
  %v424 = vunpack.c.h.b16 %v383
  %v425 = vunpack.c.l.b16 %v384
  %v426 = vunpack.c.h.b16 %v384
  %v427 = vunpack.c.l.b16 %v385
  %v428 = vunpack.c.h.b16 %v385
  %v429 = vunpack.c.l.b16 %v386
  %v430 = vunpack.c.h.b16 %v386
  %v431 = vunpack.c.l.b16 %v387
  %v432 = vunpack.c.h.b16 %v387
  %v433 = vunpack.c.l.b16 %v388
  %v434 = vunpack.c.h.b16 %v388
  %v435 = vunpack.c.l.b16 %v389
  %v436 = vunpack.c.h.b16 %v389
  %v437 = vunpack.c.l.b16 %v390
  %v438 = vunpack.c.h.b16 %v390
  %v439 = vpack.c.b16 %v407, %v407
  %v440 = vpack.c.b16 %v408, %v408
  %v441 = vpack.c.b16 %v409, %v409
  %v442 = vpack.c.b16 %v410, %v410
  %v443 = vpack.c.b16 %v411, %v411
  %v444 = vpack.c.b16 %v412, %v412
  %v445 = vpack.c.b16 %v413, %v413
  %v446 = vpack.c.b16 %v414, %v414
  %v447 = vpack.c.b16 %v415, %v415
  %v448 = vpack.c.b16 %v416, %v416
  %v449 = vpack.c.b16 %v417, %v417
  %v450 = vpack.c.b16 %v418, %v418
  %v451 = vpack.c.b16 %v419, %v419
  %v452 = vpack.c.b16 %v420, %v420
  %v453 = vpack.c.b16 %v421, %v421
  %v454 = vpack.c.b16 %v422, %v422
  %v455 = vpack.c.b16 %v423, %v423
  %v456 = vpack.c.b16 %v424, %v424
  %v457 = vpack.c.b16 %v425, %v425
  %v458 = vpack.c.b16 %v426, %v426
  %v459 = vpack.c.b16 %v427, %v427
  %v460 = vpack.c.b16 %v428, %v428
  %v461 = vpack.c.b16 %v429, %v429
  %v462 = vpack.c.b16 %v430, %v430
  %v463 = vpack.c.b16 %v431, %v431
  %v464 = vpack.c.b16 %v432, %v432
  %v465 = vpack.c.b16 %v433, %v433
  %v466 = vpack.c.b16 %v434, %v434
  %v467 = vpack.c.b16 %v435, %v435
  %v468 = vpack.c.b16 %v436, %v436
  %v469 = vpack.c.b16 %v437, %v437
  %v470 = vpack.c.b16 %v438, %v438
  %503 = vst [vmem:[%s3] sm:$0xf] %v439
  %504 = vst [vmem:[%s3 + $0x4] sm:$0xf] %v440
  %505 = vst [vmem:[%s3 + $0x8] sm:$0xf] %v441
  %506 = vst [vmem:[%s3 + $0xc] sm:$0xf] %v442
  %507 = vst [vmem:[%s3 + $0x10] sm:$0xf] %v443
  %508 = vst [vmem:[%s3 + $0x14] sm:$0xf] %v444
  %509 = vst [vmem:[%s3 + $0x18] sm:$0xf] %v445
  %510 = vst [vmem:[%s3 + $0x1c] sm:$0xf] %v446
  %511 = vst [vmem:[%s3 + $0x20] sm:$0xf] %v447
  %512 = vst [vmem:[%s3 + $0x24] sm:$0xf] %v448
  %513 = vst [vmem:[%s3 + $0x28] sm:$0xf] %v449
  %514 = vst [vmem:[%s3 + $0x2c] sm:$0xf] %v450
  %515 = vst [vmem:[%s3 + $0x30] sm:$0xf] %v451
  %516 = vst [vmem:[%s3 + $0x34] sm:$0xf] %v452
  %517 = vst [vmem:[%s3 + $0x38] sm:$0xf] %v453
  %518 = vst [vmem:[%s3 + $0x3c] sm:$0xf] %v454
  %519 = vst [vmem:[%s3 + $0x40] sm:$0xf] %v455
  %520 = vst [vmem:[%s3 + $0x44] sm:$0xf] %v456
  %521 = vst [vmem:[%s3 + $0x48] sm:$0xf] %v457
  %522 = vst [vmem:[%s3 + $0x4c] sm:$0xf] %v458
  %523 = vst [vmem:[%s3 + $0x50] sm:$0xf] %v459
  %524 = vst [vmem:[%s3 + $0x54] sm:$0xf] %v460
  %525 = vst [vmem:[%s3 + $0x58] sm:$0xf] %v461
  %526 = vst [vmem:[%s3 + $0x5c] sm:$0xf] %v462
  %527 = vst [vmem:[%s3 + $0x60] sm:$0xf] %v463
  %528 = vst [vmem:[%s3 + $0x64] sm:$0xf] %v464
  %529 = vst [vmem:[%s3 + $0x68] sm:$0xf] %v465
  %530 = vst [vmem:[%s3 + $0x6c] sm:$0xf] %v466
  %531 = vst [vmem:[%s3 + $0x70] sm:$0xf] %v467
  %532 = vst [vmem:[%s3 + $0x74] sm:$0xf] %v468
  %533 = vst [vmem:[%s3 + $0x78] sm:$0xf] %v469
  %534 = vst [vmem:[%s3 + $0x7c] sm:$0xf] %v470
  // Predicated region
  $region14: #{gin_forward.4} parent=0 // pred_check
    _
  $region15: #{gin_forward.4} parent=0 // pred_check_branch
    %536 = sbr.rel (0) target = $region17
  $region16: #{gin_forward.4} parent=0 // pred_region
    _
  $region17: #{gin_forward.4} parent=0 // pred_fallthru
    _
  // Predicated region
  $region18: #{gin_forward.4} parent=0 // pred_check
    _
  $region19: #{gin_forward.4} parent=0 // pred_check_branch
    %538 = sbr.rel (0) target = $region21
  $region20: #{gin_forward.4} parent=0 // pred_region
    _
  $region21: #{gin_forward.4} parent=0 // pred_fallthru
    _

// kernel: gin_forward.7
$region0: #{gin_forward.7}
  #allocation0 [shape = 'u32[]', space=smem, size = 0x4, offset = 0x4, fixed_abs, tag = 'smem constant byte address 0x4 - core index']
  #allocation1 [shape = 'u32[144,128]{1,0:T(1,128)}', space=vmem, size = 0x12000, scoped, tag = 'internal scratch']
  %s0 = inlined_call_operand.vmem [shape: bf16[16,256], index: 0, kind: input, shape index: {}]
  %s1 = inlined_call_operand.vmem [shape: bf16[256,128], index: 1, kind: input, shape index: {}]
  %s2 = inlined_call_operand.vmem [shape: bf16[128,128], index: 2, kind: input, shape index: {}]
  %s3 = inlined_call_operand.vmem [shape: f32[1,128], index: 3, kind: input, shape index: {}]
  %s4 = inlined_call_operand.vmem [shape: bf16[128,128], index: 4, kind: input, shape index: {}]
  %s5 = inlined_call_operand.vmem [shape: f32[1,128], index: 5, kind: input, shape index: {}]
  %s6 = inlined_call_operand.vmem [shape: f32[16,128], index: 6, kind: output, shape index: {0}]
  %s7 = inlined_call_operand.vmem [shape: f32[16,128], index: 7, kind: output, shape index: {1}]
  %8 = xla_tuple %s6, %s7
  %s9 = sld [smem:[#allocation0]]
  $region50: #{gin_forward.7} parent=0
    _
  %s11 = ssub.s32 1, %s9
  %s12 = scalar_select 0, %s11, %s9
  // Predicated region
  $region2: #{gin_forward.7} parent=0 // pred_check
    _
  $region3: #{gin_forward.7} parent=0 // pred_check_branch
    %14 = sbr.rel (0) target = $region5
  $region4: #{gin_forward.7} parent=0 // pred_region
    _
  $region5: #{gin_forward.7} parent=0 // pred_fallthru
    _
  // Predicated region
  $region6: #{gin_forward.7} parent=0 // pred_check
    _
  $region7: #{gin_forward.7} parent=0 // pred_check_branch
    %16 = sbr.rel (0) target = $region9
  $region8: #{gin_forward.7} parent=0 // pred_region
    _
  $region9: #{gin_forward.7} parent=0 // pred_fallthru
    _
  // Predicated region
  $region10: #{gin_forward.7} parent=0 // pred_check
    _
  $region11: #{gin_forward.7} parent=0 // pred_check_branch
    %18 = sbr.rel (0) target = $region13
  $region12: #{gin_forward.7} parent=0 // pred_region
    _
  $region13: #{gin_forward.7} parent=0 // pred_fallthru
    _
  // Predicated region
  $region14: #{gin_forward.7} parent=0 // pred_check
    _
  $region15: #{gin_forward.7} parent=0 // pred_check_branch
    %20 = sbr.rel (0) target = $region17
  $region16: #{gin_forward.7} parent=0 // pred_region
    _
  $region17: #{gin_forward.7} parent=0 // pred_fallthru
    _
  // Predicated region
  $region18: #{gin_forward.7} parent=0 // pred_check
    _
  $region19: #{gin_forward.7} parent=0 // pred_check_branch
    %22 = sbr.rel (0) target = $region21
  $region20: #{gin_forward.7} parent=0 // pred_region
    _
  $region21: #{gin_forward.7} parent=0 // pred_fallthru
    _
  // Predicated region
  $region22: #{gin_forward.7} parent=0 // pred_check
    _
  $region23: #{gin_forward.7} parent=0 // pred_check_branch
    %24 = sbr.rel (0) target = $region25
  $region24: #{gin_forward.7} parent=0 // pred_region
    _
  $region25: #{gin_forward.7} parent=0 // pred_fallthru
    _
  %p26 = scmp.eq.s32.totalorder 0, 0
  // Predicated region
  $region26: #{gin_forward.7} parent=0 // pred_check
    %p27 = pneg %p26
  $region27: #{gin_forward.7} parent=0 // pred_check_branch
    %29 = sbr.rel (%p27) target = $region29
  $region28: #{gin_forward.7} parent=0 // pred_region
    %30 = vst [vmem:[%s6] sm:$0xff] 0.0
    %31 = vst [vmem:[%s6 + $0x8] sm:$0xff] 0.0
  $region29: #{gin_forward.7} parent=0 // pred_fallthru
    _
  %v32 = vld [vmem:[%s6] sm:$0xff]
  %v33 = vld [vmem:[%s6 + $0x8] sm:$0xff]
  %v34 = vld [vmem:[%s0] sm:$0xff]
  %v35 = vld [vmem:[%s0 + $0x8] sm:$0xff]
  %v36 = vld [vmem:[%s1] sm:$0xf]
  %v37 = vld [vmem:[%s1 + $0x4] sm:$0xf]
  %v38 = vld [vmem:[%s1 + $0x8] sm:$0xf]
  %v39 = vld [vmem:[%s1 + $0xc] sm:$0xf]
  %v40 = vld [vmem:[%s1 + $0x10] sm:$0xf]
  %v41 = vld [vmem:[%s1 + $0x14] sm:$0xf]
  %v42 = vld [vmem:[%s1 + $0x18] sm:$0xf]
  %v43 = vld [vmem:[%s1 + $0x1c] sm:$0xf]
  %v44 = vld [vmem:[%s1 + $0x20] sm:$0xf]
  %v45 = vld [vmem:[%s1 + $0x24] sm:$0xf]
  %v46 = vld [vmem:[%s1 + $0x28] sm:$0xf]
  %v47 = vld [vmem:[%s1 + $0x2c] sm:$0xf]
  %v48 = vld [vmem:[%s1 + $0x30] sm:$0xf]
  %v49 = vld [vmem:[%s1 + $0x34] sm:$0xf]
  %v50 = vld [vmem:[%s1 + $0x38] sm:$0xf]
  %v51 = vld [vmem:[%s1 + $0x3c] sm:$0xf]
  %v52 = vld [vmem:[%s1 + $0x40] sm:$0xf]
  %v53 = vld [vmem:[%s1 + $0x44] sm:$0xf]
  %v54 = vld [vmem:[%s1 + $0x48] sm:$0xf]
  %v55 = vld [vmem:[%s1 + $0x4c] sm:$0xf]
  %v56 = vld [vmem:[%s1 + $0x50] sm:$0xf]
  %v57 = vld [vmem:[%s1 + $0x54] sm:$0xf]
  %v58 = vld [vmem:[%s1 + $0x58] sm:$0xf]
  %v59 = vld [vmem:[%s1 + $0x5c] sm:$0xf]
  %v60 = vld [vmem:[%s1 + $0x60] sm:$0xf]
  %v61 = vld [vmem:[%s1 + $0x64] sm:$0xf]
  %v62 = vld [vmem:[%s1 + $0x68] sm:$0xf]
  %v63 = vld [vmem:[%s1 + $0x6c] sm:$0xf]
  %v64 = vld [vmem:[%s1 + $0x70] sm:$0xf]
  %v65 = vld [vmem:[%s1 + $0x74] sm:$0xf]
  %v66 = vld [vmem:[%s1 + $0x78] sm:$0xf]
  %v67 = vld [vmem:[%s1 + $0x7c] sm:$0xf]
  %v70 = vunpack.c.l.b16 %v34
  %v71 = vunpack.c.h.b16 %v34
  %v72 = vunpack.c.l.b16 %v35
  %v73 = vunpack.c.h.b16 %v35
  %v74 = vpack.c.b16 %v72, %v70
  %v75 = vpack.c.b16 %v73, %v71
  %v110 = vunpack.c.l.b16 %v36
  %v111 = vunpack.c.l.b16 %v37
  %v112 = vunpack.c.l.b16 %v38
  %v113 = vunpack.c.l.b16 %v39
  %v114 = vunpack.c.l.b16 %v40
  %v115 = vunpack.c.l.b16 %v41
  %v116 = vunpack.c.l.b16 %v42
  %v117 = vunpack.c.l.b16 %v43
  %v118 = vunpack.c.l.b16 %v44
  %v119 = vunpack.c.l.b16 %v45
  %v120 = vunpack.c.l.b16 %v46
  %v121 = vunpack.c.l.b16 %v47
  %v122 = vunpack.c.l.b16 %v48
  %v123 = vunpack.c.l.b16 %v49
  %v124 = vunpack.c.l.b16 %v50
  %v125 = vunpack.c.l.b16 %v51
  %v126 = vunpack.c.l.b16 %v52
  %v127 = vunpack.c.l.b16 %v53
  %v128 = vunpack.c.l.b16 %v54
  %v129 = vunpack.c.l.b16 %v55
  %v130 = vunpack.c.l.b16 %v56
  %v131 = vunpack.c.l.b16 %v57
  %v132 = vunpack.c.l.b16 %v58
  %v133 = vunpack.c.l.b16 %v59
  %v134 = vunpack.c.l.b16 %v60
  %v135 = vunpack.c.l.b16 %v61
  %v136 = vunpack.c.l.b16 %v62
  %v137 = vunpack.c.l.b16 %v63
  %v138 = vunpack.c.l.b16 %v64
  %v139 = vunpack.c.l.b16 %v65
  %v140 = vunpack.c.l.b16 %v66
  %v141 = vunpack.c.l.b16 %v67
  %v142 = vpack.c.b16 %v111, %v110
  %v143 = vpack.c.b16 %v113, %v112
  %v144 = vpack.c.b16 %v115, %v114
  %v145 = vpack.c.b16 %v117, %v116
  %v146 = vpack.c.b16 %v119, %v118
  %v147 = vpack.c.b16 %v121, %v120
  %v148 = vpack.c.b16 %v123, %v122
  %v149 = vpack.c.b16 %v125, %v124
  %v150 = vpack.c.b16 %v127, %v126
  %v151 = vpack.c.b16 %v129, %v128
  %v152 = vpack.c.b16 %v131, %v130
  %v153 = vpack.c.b16 %v133, %v132
  %v154 = vpack.c.b16 %v135, %v134
  %v155 = vpack.c.b16 %v137, %v136
  %v156 = vpack.c.b16 %v139, %v138
  %v157 = vpack.c.b16 %v141, %v140
  %174 = vmatprep.subr.bf16.mxu0 0
  %175 = vmatpush1.bf16.msra.mxu0 %v142
  %176 = vmatprep.subr.bf16.mxu0 0
  %177 = vmatpush1.bf16.msra.mxu0 %v143
  %178 = vmatprep.subr.bf16.mxu0 0
  %179 = vmatpush1.bf16.msra.mxu0 %v144
  %180 = vmatprep.subr.bf16.mxu0 0
  %181 = vmatpush1.bf16.msra.mxu0 %v145
  %182 = vmatprep.subr.bf16.mxu0 0
  %183 = vmatpush1.bf16.msra.mxu0 %v146
  %184 = vmatprep.subr.bf16.mxu0 0
  %185 = vmatpush1.bf16.msra.mxu0 %v147
  %186 = vmatprep.subr.bf16.mxu0 0
  %187 = vmatpush1.bf16.msra.mxu0 %v148
  %188 = vmatprep.subr.bf16.mxu0 0
  %189 = vmatpush1.bf16.msra.mxu0 %v149
  %190 = vmatprep.subr.bf16.mxu0 0
  %191 = vmatpush1.bf16.msra.mxu0 %v150
  %192 = vmatprep.subr.bf16.mxu0 0
  %193 = vmatpush1.bf16.msra.mxu0 %v151
  %194 = vmatprep.subr.bf16.mxu0 0
  %195 = vmatpush1.bf16.msra.mxu0 %v152
  %196 = vmatprep.subr.bf16.mxu0 0
  %197 = vmatpush1.bf16.msra.mxu0 %v153
  %198 = vmatprep.subr.bf16.mxu0 0
  %199 = vmatpush1.bf16.msra.mxu0 %v154
  %200 = vmatprep.subr.bf16.mxu0 0
  %201 = vmatpush1.bf16.msra.mxu0 %v155
  %202 = vmatprep.subr.bf16.mxu0 0
  %203 = vmatpush1.bf16.msra.mxu0 %v156
  %204 = vmatprep.subr.bf16.mxu0 0
  %205 = vmatpush1.bf16.msra.mxu0 %v157
  %206 = vmatprep.mubr.bf16.mxu0 %v75
  %207 = vmatmul.mubr.bf16.gmra.mrb[0].mxu0 %v74
  %v208 = vpop.f32.mrb[0].mxu0
  %v209 = vadd.f32 0.0, %v208
  %v210 = vpop.f32.mrb[0].mxu0
  %v211 = vpop.f32.mrb[0].mxu0
  %v212 = vadd.f32 0.0, %v211
  %v213 = vpop.f32.mrb[0].mxu0
  %214 = vdwg.mxu0
  %v215 = vadd.f32 %v32, %v209
  %v216 = vadd.f32 %v33, %v212
  %217 = vst [vmem:[%s6] sm:$0xff] %v215
  %218 = vst [vmem:[%s6 + $0x8] sm:$0xff] %v216
  // Predicated region
  $region30: #{gin_forward.7} parent=0 // pred_check
    %p219 = pneg %p26
  $region31: #{gin_forward.7} parent=0 // pred_check_branch
    %221 = sbr.rel (%p219) target = $region33
  $region32: #{gin_forward.7} parent=0 // pred_region
    %v222 = vld [vmem:[%s6] sm:$0xff]
    %v223 = vld [vmem:[%s6 + $0x8] sm:$0xff]
    %v224 = vpack.c.bf16 %v223, %v222
    %v225 = vld [vmem:[%s2] sm:$0xf]
    %v226 = vld [vmem:[%s2 + $0x4] sm:$0xf]
    %v227 = vld [vmem:[%s2 + $0x8] sm:$0xf]
    %v228 = vld [vmem:[%s2 + $0xc] sm:$0xf]
    %v229 = vld [vmem:[%s2 + $0x10] sm:$0xf]
    %v230 = vld [vmem:[%s2 + $0x14] sm:$0xf]
    %v231 = vld [vmem:[%s2 + $0x18] sm:$0xf]
    %v232 = vld [vmem:[%s2 + $0x1c] sm:$0xf]
    %v233 = vld [vmem:[%s2 + $0x20] sm:$0xf]
    %v234 = vld [vmem:[%s2 + $0x24] sm:$0xf]
    %v235 = vld [vmem:[%s2 + $0x28] sm:$0xf]
    %v236 = vld [vmem:[%s2 + $0x2c] sm:$0xf]
    %v237 = vld [vmem:[%s2 + $0x30] sm:$0xf]
    %v238 = vld [vmem:[%s2 + $0x34] sm:$0xf]
    %v239 = vld [vmem:[%s2 + $0x38] sm:$0xf]
    %v240 = vld [vmem:[%s2 + $0x3c] sm:$0xf]
    %v241 = vld [vmem:[%s3] sm:$0x1]
    %v243 = vlaneseq
    %v244 = vshrl.u32 %v243, 7
    %v245 = vsub.s32 0, %v244
    %v246 = vrot.slane %v241, %v245
    %v264 = vunpack.c.l.b16 %v225
    %v265 = vunpack.c.l.b16 %v226
    %v266 = vunpack.c.l.b16 %v227
    %v267 = vunpack.c.l.b16 %v228
    %v268 = vunpack.c.l.b16 %v229
    %v269 = vunpack.c.l.b16 %v230
    %v270 = vunpack.c.l.b16 %v231
    %v271 = vunpack.c.l.b16 %v232
    %v272 = vunpack.c.l.b16 %v233
    %v273 = vunpack.c.l.b16 %v234
    %v274 = vunpack.c.l.b16 %v235
    %v275 = vunpack.c.l.b16 %v236
    %v276 = vunpack.c.l.b16 %v237
    %v277 = vunpack.c.l.b16 %v238
    %v278 = vunpack.c.l.b16 %v239
    %v279 = vunpack.c.l.b16 %v240
    %v280 = vpack.c.b16 %v265, %v264
    %v281 = vpack.c.b16 %v267, %v266
    %v282 = vpack.c.b16 %v269, %v268
    %v283 = vpack.c.b16 %v271, %v270
    %v284 = vpack.c.b16 %v273, %v272
    %v285 = vpack.c.b16 %v275, %v274
    %v286 = vpack.c.b16 %v277, %v276
    %v287 = vpack.c.b16 %v279, %v278
    %296 = vmatprep.subr.bf16.mxu0 0
    %297 = vmatpush1.bf16.msra.mxu0 %v280
    %298 = vmatprep.subr.bf16.mxu0 0
    %299 = vmatpush1.bf16.msra.mxu0 %v281
    %300 = vmatprep.subr.bf16.mxu0 0
    %301 = vmatpush1.bf16.msra.mxu0 %v282
    %302 = vmatprep.subr.bf16.mxu0 0
    %303 = vmatpush1.bf16.msra.mxu0 %v283
    %304 = vmatprep.subr.bf16.mxu0 0
    %305 = vmatpush1.bf16.msra.mxu0 %v284
    %306 = vmatprep.subr.bf16.mxu0 0
    %307 = vmatpush1.bf16.msra.mxu0 %v285
    %308 = vmatprep.subr.bf16.mxu0 0
    %309 = vmatpush1.bf16.msra.mxu0 %v286
    %310 = vmatprep.subr.bf16.mxu0 0
    %311 = vmatpush1.bf16.msra.mxu0 %v287
    %312 = vmatprep.subr.bf16.mxu0 0
    %313 = vmatpush1.bf16.msra.mxu0 0
    %314 = vmatprep.subr.bf16.mxu0 0
    %315 = vmatpush1.bf16.msra.mxu0 0
    %316 = vmatprep.subr.bf16.mxu0 0
    %317 = vmatpush1.bf16.msra.mxu0 0
    %318 = vmatprep.subr.bf16.mxu0 0
    %319 = vmatpush1.bf16.msra.mxu0 0
    %320 = vmatprep.subr.bf16.mxu0 0
    %321 = vmatpush1.bf16.msra.mxu0 0
    %322 = vmatprep.subr.bf16.mxu0 0
    %323 = vmatpush1.bf16.msra.mxu0 0
    %324 = vmatprep.subr.bf16.mxu0 0
    %325 = vmatpush1.bf16.msra.mxu0 0
    %326 = vmatprep.subr.bf16.mxu0 0
    %327 = vmatpush1.bf16.msra.mxu0 0
    %328 = vmatprep.mubr.bf16.mxu0 0
    %329 = vmatmul.mubr.bf16.gmra.mrb[0].mxu0 %v224
    %v330 = vpop.f32.mrb[0].mxu0
    %v331 = vadd.f32 %v246, %v330
    %v332 = vpop.f32.mrb[0].mxu0
    %v333 = vpop.f32.mrb[0].mxu0
    %v334 = vadd.f32 %v246, %v333
    %v335 = vpop.f32.mrb[0].mxu0
    %336 = vdwg.mxu0
    %v337 = vmax.f32 %v331, 0.0
    %v338 = vmax.f32 %v334, 0.0
    %v339 = vpack.c.bf16 %v338, %v337
    %v340 = vld [vmem:[%s4] sm:$0xf]
    %v341 = vld [vmem:[%s4 + $0x4] sm:$0xf]
    %v342 = vld [vmem:[%s4 + $0x8] sm:$0xf]
    %v343 = vld [vmem:[%s4 + $0xc] sm:$0xf]
    %v344 = vld [vmem:[%s4 + $0x10] sm:$0xf]
    %v345 = vld [vmem:[%s4 + $0x14] sm:$0xf]
    %v346 = vld [vmem:[%s4 + $0x18] sm:$0xf]
    %v347 = vld [vmem:[%s4 + $0x1c] sm:$0xf]
    %v348 = vld [vmem:[%s4 + $0x20] sm:$0xf]
    %v349 = vld [vmem:[%s4 + $0x24] sm:$0xf]
    %v350 = vld [vmem:[%s4 + $0x28] sm:$0xf]
    %v351 = vld [vmem:[%s4 + $0x2c] sm:$0xf]
    %v352 = vld [vmem:[%s4 + $0x30] sm:$0xf]
    %v353 = vld [vmem:[%s4 + $0x34] sm:$0xf]
    %v354 = vld [vmem:[%s4 + $0x38] sm:$0xf]
    %v355 = vld [vmem:[%s4 + $0x3c] sm:$0xf]
    %v356 = vld [vmem:[%s5] sm:$0x1]
    %v358 = vlaneseq
    %v359 = vshrl.u32 %v358, 7
    %v360 = vsub.s32 0, %v359
    %v361 = vrot.slane %v356, %v360
    %v379 = vunpack.c.l.b16 %v340
    %v380 = vunpack.c.l.b16 %v341
    %v381 = vunpack.c.l.b16 %v342
    %v382 = vunpack.c.l.b16 %v343
    %v383 = vunpack.c.l.b16 %v344
    %v384 = vunpack.c.l.b16 %v345
    %v385 = vunpack.c.l.b16 %v346
    %v386 = vunpack.c.l.b16 %v347
    %v387 = vunpack.c.l.b16 %v348
    %v388 = vunpack.c.l.b16 %v349
    %v389 = vunpack.c.l.b16 %v350
    %v390 = vunpack.c.l.b16 %v351
    %v391 = vunpack.c.l.b16 %v352
    %v392 = vunpack.c.l.b16 %v353
    %v393 = vunpack.c.l.b16 %v354
    %v394 = vunpack.c.l.b16 %v355
    %v395 = vpack.c.b16 %v380, %v379
    %v396 = vpack.c.b16 %v382, %v381
    %v397 = vpack.c.b16 %v384, %v383
    %v398 = vpack.c.b16 %v386, %v385
    %v399 = vpack.c.b16 %v388, %v387
    %v400 = vpack.c.b16 %v390, %v389
    %v401 = vpack.c.b16 %v392, %v391
    %v402 = vpack.c.b16 %v394, %v393
    %411 = vmatprep.subr.bf16.mxu0 0
    %412 = vmatpush1.bf16.msra.mxu0 %v395
    %413 = vmatprep.subr.bf16.mxu0 0
    %414 = vmatpush1.bf16.msra.mxu0 %v396
    %415 = vmatprep.subr.bf16.mxu0 0
    %416 = vmatpush1.bf16.msra.mxu0 %v397
    %417 = vmatprep.subr.bf16.mxu0 0
    %418 = vmatpush1.bf16.msra.mxu0 %v398
    %419 = vmatprep.subr.bf16.mxu0 0
    %420 = vmatpush1.bf16.msra.mxu0 %v399
    %421 = vmatprep.subr.bf16.mxu0 0
    %422 = vmatpush1.bf16.msra.mxu0 %v400
    %423 = vmatprep.subr.bf16.mxu0 0
    %424 = vmatpush1.bf16.msra.mxu0 %v401
    %425 = vmatprep.subr.bf16.mxu0 0
    %426 = vmatpush1.bf16.msra.mxu0 %v402
    %427 = vmatprep.subr.bf16.mxu0 0
    %428 = vmatpush1.bf16.msra.mxu0 0
    %429 = vmatprep.subr.bf16.mxu0 0
    %430 = vmatpush1.bf16.msra.mxu0 0
    %431 = vmatprep.subr.bf16.mxu0 0
    %432 = vmatpush1.bf16.msra.mxu0 0
    %433 = vmatprep.subr.bf16.mxu0 0
    %434 = vmatpush1.bf16.msra.mxu0 0
    %435 = vmatprep.subr.bf16.mxu0 0
    %436 = vmatpush1.bf16.msra.mxu0 0
    %437 = vmatprep.subr.bf16.mxu0 0
    %438 = vmatpush1.bf16.msra.mxu0 0
    %439 = vmatprep.subr.bf16.mxu0 0
    %440 = vmatpush1.bf16.msra.mxu0 0
    %441 = vmatprep.subr.bf16.mxu0 0
    %442 = vmatpush1.bf16.msra.mxu0 0
    %443 = vmatprep.mubr.bf16.mxu0 0
    %444 = vmatmul.mubr.bf16.gmra.mrb[0].mxu0 %v339
    %v445 = vpop.f32.mrb[0].mxu0
    %v446 = vadd.f32 %v361, %v445
    %v447 = vpop.f32.mrb[0].mxu0
    %v448 = vpop.f32.mrb[0].mxu0
    %v449 = vadd.f32 %v361, %v448
    %v450 = vpop.f32.mrb[0].mxu0
    %451 = vdwg.mxu0
    %452 = vst [vmem:[%s7] sm:$0xff] %v446
    %453 = vst [vmem:[%s7 + $0x8] sm:$0xff] %v449
  $region33: #{gin_forward.7} parent=0 // pred_fallthru
    _
  // Predicated region
  $region34: #{gin_forward.7} parent=0 // pred_check
    _
  $region35: #{gin_forward.7} parent=0 // pred_check_branch
    %455 = sbr.rel (0) target = $region37
  $region36: #{gin_forward.7} parent=0 // pred_region
    _
  $region37: #{gin_forward.7} parent=0 // pred_fallthru
    _
  // Predicated region
  $region38: #{gin_forward.7} parent=0 // pred_check
    _
  $region39: #{gin_forward.7} parent=0 // pred_check_branch
    %457 = sbr.rel (0) target = $region41
  $region40: #{gin_forward.7} parent=0 // pred_region
    _
  $region41: #{gin_forward.7} parent=0 // pred_fallthru
    _
  // Predicated region
  $region42: #{gin_forward.7} parent=0 // pred_check
    _
  $region43: #{gin_forward.7} parent=0 // pred_check_branch
    %459 = sbr.rel (0) target = $region45
  $region44: #{gin_forward.7} parent=0 // pred_region
    _
  $region45: #{gin_forward.7} parent=0 // pred_fallthru
    _
  // Predicated region
  $region46: #{gin_forward.7} parent=0 // pred_check
    _
  $region47: #{gin_forward.7} parent=0 // pred_check_branch
    %461 = sbr.rel (0) target = $region49
  $region48: #{gin_forward.7} parent=0 // pred_region
    _
  $region49: #{gin_forward.7} parent=0 // pred_fallthru
    _

// kernel: gin_forward.5
$region0: #{gin_forward.5}
  #allocation0 [shape = 'u32[]', space=smem, size = 0x4, offset = 0x4, fixed_abs, tag = 'smem constant byte address 0x4 - core index']
  #allocation1 [shape = 'u32[144,128]{1,0:T(1,128)}', space=vmem, size = 0x12000, scoped, tag = 'internal scratch']
  #allocation2 [shape = 'f32[256,128]{1,0:T(8,128)}', space=vmem, size = 0x20000, scoped, tag = 'scratch operand']
  %s0 = inlined_call_operand.vmem [shape: bf16[256,256], index: 0, kind: input, shape index: {}]
  %s1 = inlined_call_operand.vmem [shape: bf16[256,128], index: 1, kind: input, shape index: {}]
  %s2 = inlined_call_operand.vmem [shape: bf16[128,128], index: 2, kind: input, shape index: {}]
  %s3 = inlined_call_operand.vmem [shape: f32[1,128], index: 3, kind: input, shape index: {}]
  %s4 = inlined_call_operand.vmem [shape: bf16[128,128], index: 4, kind: input, shape index: {}]
  %s5 = inlined_call_operand.vmem [shape: f32[1,128], index: 5, kind: input, shape index: {}]
  %s6 = inlined_call_operand.vmem [shape: bf16[256,128], index: 6, kind: output, shape index: {}]
  %s7 = sld [smem:[#allocation0]]
  $region42: #{gin_forward.5} parent=0
    _
  %s9 = ssub.s32 1, %s7
  %s10 = scalar_select 0, %s9, %s7
  // Predicated region
  $region2: #{gin_forward.5} parent=0 // pred_check
    _
  $region3: #{gin_forward.5} parent=0 // pred_check_branch
    %12 = sbr.rel (0) target = $region5
  $region4: #{gin_forward.5} parent=0 // pred_region
    _
  $region5: #{gin_forward.5} parent=0 // pred_fallthru
    _
  // Predicated region
  $region6: #{gin_forward.5} parent=0 // pred_check
    _
  $region7: #{gin_forward.5} parent=0 // pred_check_branch
    %14 = sbr.rel (0) target = $region9
  $region8: #{gin_forward.5} parent=0 // pred_region
    _
  $region9: #{gin_forward.5} parent=0 // pred_fallthru
    _
  // Predicated region
  $region10: #{gin_forward.5} parent=0 // pred_check
    _
  $region11: #{gin_forward.5} parent=0 // pred_check_branch
    %16 = sbr.rel (0) target = $region13
  $region12: #{gin_forward.5} parent=0 // pred_region
    _
  $region13: #{gin_forward.5} parent=0 // pred_fallthru
    _
  // Predicated region
  $region14: #{gin_forward.5} parent=0 // pred_check
    _
  $region15: #{gin_forward.5} parent=0 // pred_check_branch
    %18 = sbr.rel (0) target = $region17
  $region16: #{gin_forward.5} parent=0 // pred_region
    _
  $region17: #{gin_forward.5} parent=0 // pred_fallthru
    _
  // Predicated region
  $region18: #{gin_forward.5} parent=0 // pred_check
    _
  $region19: #{gin_forward.5} parent=0 // pred_check_branch
    %20 = sbr.rel (0) target = $region21
  $region20: #{gin_forward.5} parent=0 // pred_region
    _
  $region21: #{gin_forward.5} parent=0 // pred_fallthru
    _
  // Predicated region
  $region22: #{gin_forward.5} parent=0 // pred_check
    _
  $region23: #{gin_forward.5} parent=0 // pred_check_branch
    %22 = sbr.rel (0) target = $region25
  $region24: #{gin_forward.5} parent=0 // pred_region
    _
  $region25: #{gin_forward.5} parent=0 // pred_fallthru
    _
  %p24 = scmp.eq.s32.totalorder 0, 0
  // Predicated region
  $region26: #{gin_forward.5} parent=0 // pred_check
    %p25 = pneg %p24
  $region27: #{gin_forward.5} parent=0 // pred_check_branch
    %27 = sbr.rel (%p25) target = $region29
  $region28: #{gin_forward.5} parent=0 // pred_region
    %28 = vst [vmem:[#allocation2] sm:$0xff] 0.0
    %29 = vst [vmem:[#allocation2 + $0x8] sm:$0xff] 0.0
    %30 = vst [vmem:[#allocation2 + $0x10] sm:$0xff] 0.0
    %31 = vst [vmem:[#allocation2 + $0x18] sm:$0xff] 0.0
    %32 = vst [vmem:[#allocation2 + $0x20] sm:$0xff] 0.0
    %33 = vst [vmem:[#allocation2 + $0x28] sm:$0xff] 0.0
    %34 = vst [vmem:[#allocation2 + $0x30] sm:$0xff] 0.0
    %35 = vst [vmem:[#allocation2 + $0x38] sm:$0xff] 0.0
    %36 = vst [vmem:[#allocation2 + $0x40] sm:$0xff] 0.0
    %37 = vst [vmem:[#allocation2 + $0x48] sm:$0xff] 0.0
    %38 = vst [vmem:[#allocation2 + $0x50] sm:$0xff] 0.0
    %39 = vst [vmem:[#allocation2 + $0x58] sm:$0xff] 0.0
    %40 = vst [vmem:[#allocation2 + $0x60] sm:$0xff] 0.0
    %41 = vst [vmem:[#allocation2 + $0x68] sm:$0xff] 0.0
    %42 = vst [vmem:[#allocation2 + $0x70] sm:$0xff] 0.0
    %43 = vst [vmem:[#allocation2 + $0x78] sm:$0xff] 0.0
    %44 = vst [vmem:[#allocation2 + $0x80] sm:$0xff] 0.0
    %45 = vst [vmem:[#allocation2 + $0x88] sm:$0xff] 0.0
    %46 = vst [vmem:[#allocation2 + $0x90] sm:$0xff] 0.0
    %47 = vst [vmem:[#allocation2 + $0x98] sm:$0xff] 0.0
    %48 = vst [vmem:[#allocation2 + $0xa0] sm:$0xff] 0.0
    %49 = vst [vmem:[#allocation2 + $0xa8] sm:$0xff] 0.0
    %50 = vst [vmem:[#allocation2 + $0xb0] sm:$0xff] 0.0
    %51 = vst [vmem:[#allocation2 + $0xb8] sm:$0xff] 0.0
    %52 = vst [vmem:[#allocation2 + $0xc0] sm:$0xff] 0.0
    %53 = vst [vmem:[#allocation2 + $0xc8] sm:$0xff] 0.0
    %54 = vst [vmem:[#allocation2 + $0xd0] sm:$0xff] 0.0
    %55 = vst [vmem:[#allocation2 + $0xd8] sm:$0xff] 0.0
    %56 = vst [vmem:[#allocation2 + $0xe0] sm:$0xff] 0.0
    %57 = vst [vmem:[#allocation2 + $0xe8] sm:$0xff] 0.0
    %58 = vst [vmem:[#allocation2 + $0xf0] sm:$0xff] 0.0
    %59 = vst [vmem:[#allocation2 + $0xf8] sm:$0xff] 0.0
  $region29: #{gin_forward.5} parent=0 // pred_fallthru
    _
  %v60 = vld [vmem:[#allocation2] sm:$0xff]
  %v61 = vld [vmem:[#allocation2 + $0x8] sm:$0xff]
  %v62 = vld [vmem:[#allocation2 + $0x10] sm:$0xff]
  %v63 = vld [vmem:[#allocation2 + $0x18] sm:$0xff]
  %v64 = vld [vmem:[#allocation2 + $0x20] sm:$0xff]
  %v65 = vld [vmem:[#allocation2 + $0x28] sm:$0xff]
  %v66 = vld [vmem:[#allocation2 + $0x30] sm:$0xff]
  %v67 = vld [vmem:[#allocation2 + $0x38] sm:$0xff]
  %v68 = vld [vmem:[#allocation2 + $0x40] sm:$0xff]
  %v69 = vld [vmem:[#allocation2 + $0x48] sm:$0xff]
  %v70 = vld [vmem:[#allocation2 + $0x50] sm:$0xff]
  %v71 = vld [vmem:[#allocation2 + $0x58] sm:$0xff]
  %v72 = vld [vmem:[#allocation2 + $0x60] sm:$0xff]
  %v73 = vld [vmem:[#allocation2 + $0x68] sm:$0xff]
  %v74 = vld [vmem:[#allocation2 + $0x70] sm:$0xff]
  %v75 = vld [vmem:[#allocation2 + $0x78] sm:$0xff]
  %v76 = vld [vmem:[#allocation2 + $0x80] sm:$0xff]
  %v77 = vld [vmem:[#allocation2 + $0x88] sm:$0xff]
  %v78 = vld [vmem:[#allocation2 + $0x90] sm:$0xff]
  %v79 = vld [vmem:[#allocation2 + $0x98] sm:$0xff]
  %v80 = vld [vmem:[#allocation2 + $0xa0] sm:$0xff]
  %v81 = vld [vmem:[#allocation2 + $0xa8] sm:$0xff]
  %v82 = vld [vmem:[#allocation2 + $0xb0] sm:$0xff]
  %v83 = vld [vmem:[#allocation2 + $0xb8] sm:$0xff]
  %v84 = vld [vmem:[#allocation2 + $0xc0] sm:$0xff]
  %v85 = vld [vmem:[#allocation2 + $0xc8] sm:$0xff]
  %v86 = vld [vmem:[#allocation2 + $0xd0] sm:$0xff]
  %v87 = vld [vmem:[#allocation2 + $0xd8] sm:$0xff]
  %v88 = vld [vmem:[#allocation2 + $0xe0] sm:$0xff]
  %v89 = vld [vmem:[#allocation2 + $0xe8] sm:$0xff]
  %v90 = vld [vmem:[#allocation2 + $0xf0] sm:$0xff]
  %v91 = vld [vmem:[#allocation2 + $0xf8] sm:$0xff]
  %v92 = vld [vmem:[%s0] sm:$0xff]
  %v93 = vld [vmem:[%s0 + $0x8] sm:$0xff]
  %v94 = vld [vmem:[%s0 + $0x10] sm:$0xff]
  %v95 = vld [vmem:[%s0 + $0x18] sm:$0xff]
  %v96 = vld [vmem:[%s0 + $0x20] sm:$0xff]
  %v97 = vld [vmem:[%s0 + $0x28] sm:$0xff]
  %v98 = vld [vmem:[%s0 + $0x30] sm:$0xff]
  %v99 = vld [vmem:[%s0 + $0x38] sm:$0xff]
  %v100 = vld [vmem:[%s0 + $0x40] sm:$0xff]
  %v101 = vld [vmem:[%s0 + $0x48] sm:$0xff]
  %v102 = vld [vmem:[%s0 + $0x50] sm:$0xff]
  %v103 = vld [vmem:[%s0 + $0x58] sm:$0xff]
  %v104 = vld [vmem:[%s0 + $0x60] sm:$0xff]
  %v105 = vld [vmem:[%s0 + $0x68] sm:$0xff]
  %v106 = vld [vmem:[%s0 + $0x70] sm:$0xff]
  %v107 = vld [vmem:[%s0 + $0x78] sm:$0xff]
  %v108 = vld [vmem:[%s0 + $0x80] sm:$0xff]
  %v109 = vld [vmem:[%s0 + $0x88] sm:$0xff]
  %v110 = vld [vmem:[%s0 + $0x90] sm:$0xff]
  %v111 = vld [vmem:[%s0 + $0x98] sm:$0xff]
  %v112 = vld [vmem:[%s0 + $0xa0] sm:$0xff]
  %v113 = vld [vmem:[%s0 + $0xa8] sm:$0xff]
  %v114 = vld [vmem:[%s0 + $0xb0] sm:$0xff]
  %v115 = vld [vmem:[%s0 + $0xb8] sm:$0xff]
  %v116 = vld [vmem:[%s0 + $0xc0] sm:$0xff]
  %v117 = vld [vmem:[%s0 + $0xc8] sm:$0xff]
  %v118 = vld [vmem:[%s0 + $0xd0] sm:$0xff]
  %v119 = vld [vmem:[%s0 + $0xd8] sm:$0xff]
  %v120 = vld [vmem:[%s0 + $0xe0] sm:$0xff]
  %v121 = vld [vmem:[%s0 + $0xe8] sm:$0xff]
  %v122 = vld [vmem:[%s0 + $0xf0] sm:$0xff]
  %v123 = vld [vmem:[%s0 + $0xf8] sm:$0xff]
  %v124 = vld [vmem:[%s1] sm:$0xf]
  %v125 = vld [vmem:[%s1 + $0x4] sm:$0xf]
  %v126 = vld [vmem:[%s1 + $0x8] sm:$0xf]
  %v127 = vld [vmem:[%s1 + $0xc] sm:$0xf]
  %v128 = vld [vmem:[%s1 + $0x10] sm:$0xf]
  %v129 = vld [vmem:[%s1 + $0x14] sm:$0xf]
  %v130 = vld [vmem:[%s1 + $0x18] sm:$0xf]
  %v131 = vld [vmem:[%s1 + $0x1c] sm:$0xf]
  %v132 = vld [vmem:[%s1 + $0x20] sm:$0xf]
  %v133 = vld [vmem:[%s1 + $0x24] sm:$0xf]
  %v134 = vld [vmem:[%s1 + $0x28] sm:$0xf]
  %v135 = vld [vmem:[%s1 + $0x2c] sm:$0xf]
  %v136 = vld [vmem:[%s1 + $0x30] sm:$0xf]
  %v137 = vld [vmem:[%s1 + $0x34] sm:$0xf]
  %v138 = vld [vmem:[%s1 + $0x38] sm:$0xf]
  %v139 = vld [vmem:[%s1 + $0x3c] sm:$0xf]
  %v140 = vld [vmem:[%s1 + $0x40] sm:$0xf]
  %v141 = vld [vmem:[%s1 + $0x44] sm:$0xf]
  %v142 = vld [vmem:[%s1 + $0x48] sm:$0xf]
  %v143 = vld [vmem:[%s1 + $0x4c] sm:$0xf]
  %v144 = vld [vmem:[%s1 + $0x50] sm:$0xf]
  %v145 = vld [vmem:[%s1 + $0x54] sm:$0xf]
  %v146 = vld [vmem:[%s1 + $0x58] sm:$0xf]
  %v147 = vld [vmem:[%s1 + $0x5c] sm:$0xf]
  %v148 = vld [vmem:[%s1 + $0x60] sm:$0xf]
  %v149 = vld [vmem:[%s1 + $0x64] sm:$0xf]
  %v150 = vld [vmem:[%s1 + $0x68] sm:$0xf]
  %v151 = vld [vmem:[%s1 + $0x6c] sm:$0xf]
  %v152 = vld [vmem:[%s1 + $0x70] sm:$0xf]
  %v153 = vld [vmem:[%s1 + $0x74] sm:$0xf]
  %v154 = vld [vmem:[%s1 + $0x78] sm:$0xf]
  %v155 = vld [vmem:[%s1 + $0x7c] sm:$0xf]
  %v188 = vunpack.c.l.b16 %v92
  %v189 = vunpack.c.h.b16 %v92
  %v190 = vunpack.c.l.b16 %v93
  %v191 = vunpack.c.h.b16 %v93
  %v192 = vunpack.c.l.b16 %v94
  %v193 = vunpack.c.h.b16 %v94
  %v194 = vunpack.c.l.b16 %v95
  %v195 = vunpack.c.h.b16 %v95
  %v196 = vunpack.c.l.b16 %v96
  %v197 = vunpack.c.h.b16 %v96
  %v198 = vunpack.c.l.b16 %v97
  %v199 = vunpack.c.h.b16 %v97
  %v200 = vunpack.c.l.b16 %v98
  %v201 = vunpack.c.h.b16 %v98
  %v202 = vunpack.c.l.b16 %v99
  %v203 = vunpack.c.h.b16 %v99
  %v204 = vunpack.c.l.b16 %v100
  %v205 = vunpack.c.h.b16 %v100
  %v206 = vunpack.c.l.b16 %v101
  %v207 = vunpack.c.h.b16 %v101
  %v208 = vunpack.c.l.b16 %v102
  %v209 = vunpack.c.h.b16 %v102
  %v210 = vunpack.c.l.b16 %v103
  %v211 = vunpack.c.h.b16 %v103
  %v212 = vunpack.c.l.b16 %v104
  %v213 = vunpack.c.h.b16 %v104
  %v214 = vunpack.c.l.b16 %v105
  %v215 = vunpack.c.h.b16 %v105
  %v216 = vunpack.c.l.b16 %v106
  %v217 = vunpack.c.h.b16 %v106
  %v218 = vunpack.c.l.b16 %v107
  %v219 = vunpack.c.h.b16 %v107
  %v220 = vunpack.c.l.b16 %v108
  %v221 = vunpack.c.h.b16 %v108
  %v222 = vunpack.c.l.b16 %v109
  %v223 = vunpack.c.h.b16 %v109
  %v224 = vunpack.c.l.b16 %v110
  %v225 = vunpack.c.h.b16 %v110
  %v226 = vunpack.c.l.b16 %v111
  %v227 = vunpack.c.h.b16 %v111
  %v228 = vunpack.c.l.b16 %v112
  %v229 = vunpack.c.h.b16 %v112
  %v230 = vunpack.c.l.b16 %v113
  %v231 = vunpack.c.h.b16 %v113
  %v232 = vunpack.c.l.b16 %v114
  %v233 = vunpack.c.h.b16 %v114
  %v234 = vunpack.c.l.b16 %v115
  %v235 = vunpack.c.h.b16 %v115
  %v236 = vunpack.c.l.b16 %v116
  %v237 = vunpack.c.h.b16 %v116
  %v238 = vunpack.c.l.b16 %v117
  %v239 = vunpack.c.h.b16 %v117
  %v240 = vunpack.c.l.b16 %v118
  %v241 = vunpack.c.h.b16 %v118
  %v242 = vunpack.c.l.b16 %v119
  %v243 = vunpack.c.h.b16 %v119
  %v244 = vunpack.c.l.b16 %v120
  %v245 = vunpack.c.h.b16 %v120
  %v246 = vunpack.c.l.b16 %v121
  %v247 = vunpack.c.h.b16 %v121
  %v248 = vunpack.c.l.b16 %v122
  %v249 = vunpack.c.h.b16 %v122
  %v250 = vunpack.c.l.b16 %v123
  %v251 = vunpack.c.h.b16 %v123
  %v252 = vpack.c.b16 %v190, %v188
  %v253 = vpack.c.b16 %v191, %v189
  %v254 = vpack.c.b16 %v194, %v192
  %v255 = vpack.c.b16 %v195, %v193
  %v256 = vpack.c.b16 %v198, %v196
  %v257 = vpack.c.b16 %v199, %v197
  %v258 = vpack.c.b16 %v202, %v200
  %v259 = vpack.c.b16 %v203, %v201
  %v260 = vpack.c.b16 %v206, %v204
  %v261 = vpack.c.b16 %v207, %v205
  %v262 = vpack.c.b16 %v210, %v208
  %v263 = vpack.c.b16 %v211, %v209
  %v264 = vpack.c.b16 %v214, %v212
  %v265 = vpack.c.b16 %v215, %v213
  %v266 = vpack.c.b16 %v218, %v216
  %v267 = vpack.c.b16 %v219, %v217
  %v268 = vpack.c.b16 %v222, %v220
  %v269 = vpack.c.b16 %v223, %v221
  %v270 = vpack.c.b16 %v226, %v224
  %v271 = vpack.c.b16 %v227, %v225
  %v272 = vpack.c.b16 %v230, %v228
  %v273 = vpack.c.b16 %v231, %v229
  %v274 = vpack.c.b16 %v234, %v232
  %v275 = vpack.c.b16 %v235, %v233
  %v276 = vpack.c.b16 %v238, %v236
  %v277 = vpack.c.b16 %v239, %v237
  %v278 = vpack.c.b16 %v242, %v240
  %v279 = vpack.c.b16 %v243, %v241
  %v280 = vpack.c.b16 %v246, %v244
  %v281 = vpack.c.b16 %v247, %v245
  %v282 = vpack.c.b16 %v250, %v248
  %v283 = vpack.c.b16 %v251, %v249
  %v348 = vunpack.c.l.b16 %v124
  %v349 = vunpack.c.l.b16 %v125
  %v350 = vunpack.c.l.b16 %v126
  %v351 = vunpack.c.l.b16 %v127
  %v352 = vunpack.c.l.b16 %v128
  %v353 = vunpack.c.l.b16 %v129
  %v354 = vunpack.c.l.b16 %v130
  %v355 = vunpack.c.l.b16 %v131
  %v356 = vunpack.c.l.b16 %v132
  %v357 = vunpack.c.l.b16 %v133
  %v358 = vunpack.c.l.b16 %v134
  %v359 = vunpack.c.l.b16 %v135
  %v360 = vunpack.c.l.b16 %v136
  %v361 = vunpack.c.l.b16 %v137
  %v362 = vunpack.c.l.b16 %v138
  %v363 = vunpack.c.l.b16 %v139
  %v364 = vunpack.c.l.b16 %v140
  %v365 = vunpack.c.l.b16 %v141
  %v366 = vunpack.c.l.b16 %v142
  %v367 = vunpack.c.l.b16 %v143
  %v368 = vunpack.c.l.b16 %v144
  %v369 = vunpack.c.l.b16 %v145
  %v370 = vunpack.c.l.b16 %v146
  %v371 = vunpack.c.l.b16 %v147
  %v372 = vunpack.c.l.b16 %v148
  %v373 = vunpack.c.l.b16 %v149
  %v374 = vunpack.c.l.b16 %v150
  %v375 = vunpack.c.l.b16 %v151
  %v376 = vunpack.c.l.b16 %v152
  %v377 = vunpack.c.l.b16 %v153
  %v378 = vunpack.c.l.b16 %v154
  %v379 = vunpack.c.l.b16 %v155
  %v380 = vpack.c.b16 %v349, %v348
  %v381 = vpack.c.b16 %v351, %v350
  %v382 = vpack.c.b16 %v353, %v352
  %v383 = vpack.c.b16 %v355, %v354
  %v384 = vpack.c.b16 %v357, %v356
  %v385 = vpack.c.b16 %v359, %v358
  %v386 = vpack.c.b16 %v361, %v360
  %v387 = vpack.c.b16 %v363, %v362
  %v388 = vpack.c.b16 %v365, %v364
  %v389 = vpack.c.b16 %v367, %v366
  %v390 = vpack.c.b16 %v369, %v368
  %v391 = vpack.c.b16 %v371, %v370
  %v392 = vpack.c.b16 %v373, %v372
  %v393 = vpack.c.b16 %v375, %v374
  %v394 = vpack.c.b16 %v377, %v376
  %v395 = vpack.c.b16 %v379, %v378
  %412 = vmatprep.subr.bf16.mxu0 0
  %413 = vmatpush1.bf16.msra.mxu0 %v380
  %414 = vmatprep.subr.bf16.mxu0 0
  %415 = vmatpush1.bf16.msra.mxu0 %v381
  %416 = vmatprep.subr.bf16.mxu0 0
  %417 = vmatpush1.bf16.msra.mxu0 %v382
  %418 = vmatprep.subr.bf16.mxu0 0
  %419 = vmatpush1.bf16.msra.mxu0 %v383
  %420 = vmatprep.subr.bf16.mxu0 0
  %421 = vmatpush1.bf16.msra.mxu0 %v384
  %422 = vmatprep.subr.bf16.mxu0 0
  %423 = vmatpush1.bf16.msra.mxu0 %v385
  %424 = vmatprep.subr.bf16.mxu0 0
  %425 = vmatpush1.bf16.msra.mxu0 %v386
  %426 = vmatprep.subr.bf16.mxu0 0
  %427 = vmatpush1.bf16.msra.mxu0 %v387
  %428 = vmatprep.subr.bf16.mxu0 0
  %429 = vmatpush1.bf16.msra.mxu0 %v388
  %430 = vmatprep.subr.bf16.mxu0 0
  %431 = vmatpush1.bf16.msra.mxu0 %v389
  %432 = vmatprep.subr.bf16.mxu0 0
  %433 = vmatpush1.bf16.msra.mxu0 %v390
  %434 = vmatprep.subr.bf16.mxu0 0
  %435 = vmatpush1.bf16.msra.mxu0 %v391
  %436 = vmatprep.subr.bf16.mxu0 0
  %437 = vmatpush1.bf16.msra.mxu0 %v392
  %438 = vmatprep.subr.bf16.mxu0 0
  %439 = vmatpush1.bf16.msra.mxu0 %v393
  %440 = vmatprep.subr.bf16.mxu0 0
  %441 = vmatpush1.bf16.msra.mxu0 %v394
  %442 = vmatprep.subr.bf16.mxu0 0
  %443 = vmatpush1.bf16.msra.mxu0 %v395
  %444 = vmatprep.mubr.bf16.mxu0 %v253
  %445 = vmatmul.mubr.bf16.gmra.mrb[0].mxu0 %v252
  %v446 = vpop.f32.mrb[0].mxu0
  %v447 = vadd.f32 0.0, %v446
  %v448 = vpop.f32.mrb[0].mxu0
  %v449 = vpop.f32.mrb[0].mxu0
  %v450 = vadd.f32 0.0, %v449
  %v451 = vpop.f32.mrb[0].mxu0
  %452 = vmatprep.mubr.bf16.mxu0 %v255
  %453 = vmatmul.mubr.bf16.gmra.mrb[0].mxu0 %v254
  %v454 = vpop.f32.mrb[0].mxu0
  %v455 = vadd.f32 0.0, %v454
  %v456 = vpop.f32.mrb[0].mxu0
  %v457 = vpop.f32.mrb[0].mxu0
  %v458 = vadd.f32 0.0, %v457
  %v459 = vpop.f32.mrb[0].mxu0
  %460 = vmatprep.mubr.bf16.mxu0 %v257
  %461 = vmatmul.mubr.bf16.gmra.mrb[0].mxu0 %v256
  %v462 = vpop.f32.mrb[0].mxu0
  %v463 = vadd.f32 0.0, %v462
  %v464 = vpop.f32.mrb[0].mxu0
  %v465 = vpop.f32.mrb[0].mxu0
  %v466 = vadd.f32 0.0, %v465
  %v467 = vpop.f32.mrb[0].mxu0
  %468 = vmatprep.mubr.bf16.mxu0 %v259
  %469 = vmatmul.mubr.bf16.gmra.mrb[0].mxu0 %v258
  %v470 = vpop.f32.mrb[0].mxu0
  %v471 = vadd.f32 0.0, %v470
  %v472 = vpop.f32.mrb[0].mxu0
  %v473 = vpop.f32.mrb[0].mxu0
  %v474 = vadd.f32 0.0, %v473
  %v475 = vpop.f32.mrb[0].mxu0
  %476 = vmatprep.mubr.bf16.mxu0 %v261
  %477 = vmatmul.mubr.bf16.gmra.mrb[0].mxu0 %v260
  %v478 = vpop.f32.mrb[0].mxu0
  %v479 = vadd.f32 0.0, %v478
  %v480 = vpop.f32.mrb[0].mxu0
  %v481 = vpop.f32.mrb[0].mxu0
  %v482 = vadd.f32 0.0, %v481
  %v483 = vpop.f32.mrb[0].mxu0
  %484 = vmatprep.mubr.bf16.mxu0 %v263
  %485 = vmatmul.mubr.bf16.gmra.mrb[0].mxu0 %v262
  %v486 = vpop.f32.mrb[0].mxu0
  %v487 = vadd.f32 0.0, %v486
  %v488 = vpop.f32.mrb[0].mxu0
  %v489 = vpop.f32.mrb[0].mxu0
  %v490 = vadd.f32 0.0, %v489
  %v491 = vpop.f32.mrb[0].mxu0
  %492 = vmatprep.mubr.bf16.mxu0 %v265
  %493 = vmatmul.mubr.bf16.gmra.mrb[0].mxu0 %v264
  %v494 = vpop.f32.mrb[0].mxu0
  %v495 = vadd.f32 0.0, %v494
  %v496 = vpop.f32.mrb[0].mxu0
  %v497 = vpop.f32.mrb[0].mxu0
  %v498 = vadd.f32 0.0, %v497
  %v499 = vpop.f32.mrb[0].mxu0
  %500 = vmatprep.mubr.bf16.mxu0 %v267
  %501 = vmatmul.mubr.bf16.gmra.mrb[0].mxu0 %v266
  %v502 = vpop.f32.mrb[0].mxu0
  %v503 = vadd.f32 0.0, %v502
  %v504 = vpop.f32.mrb[0].mxu0
  %v505 = vpop.f32.mrb[0].mxu0
  %v506 = vadd.f32 0.0, %v505
  %v507 = vpop.f32.mrb[0].mxu0
  %508 = vmatprep.mubr.bf16.mxu0 %v269
  %509 = vmatmul.mubr.bf16.gmra.mrb[0].mxu0 %v268
  %v510 = vpop.f32.mrb[0].mxu0
  %v511 = vadd.f32 0.0, %v510
  %v512 = vpop.f32.mrb[0].mxu0
  %v513 = vpop.f32.mrb[0].mxu0
  %v514 = vadd.f32 0.0, %v513
  %v515 = vpop.f32.mrb[0].mxu0
  %516 = vmatprep.mubr.bf16.mxu0 %v271
  %517 = vmatmul.mubr.bf16.gmra.mrb[0].mxu0 %v270
  %v518 = vpop.f32.mrb[0].mxu0
  %v519 = vadd.f32 0.0, %v518
  %v520 = vpop.f32.mrb[0].mxu0
  %v521 = vpop.f32.mrb[0].mxu0
  %v522 = vadd.f32 0.0, %v521
  %v523 = vpop.f32.mrb[0].mxu0
  %524 = vmatprep.mubr.bf16.mxu0 %v273
  %525 = vmatmul.mubr.bf16.gmra.mrb[0].mxu0 %v272
  %v526 = vpop.f32.mrb[0].mxu0
  %v527 = vadd.f32 0.0, %v526
  %v528 = vpop.f32.mrb[0].mxu0
  %v529 = vpop.f32.mrb[0].mxu0
  %v530 = vadd.f32 0.0, %v529
  %v531 = vpop.f32.mrb[0].mxu0
  %532 = vmatprep.mubr.bf16.mxu0 %v275
  %533 = vmatmul.mubr.bf16.gmra.mrb[0].mxu0 %v274
  %v534 = vpop.f32.mrb[0].mxu0
  %v535 = vadd.f32 0.0, %v534
  %v536 = vpop.f32.mrb[0].mxu0
  %v537 = vpop.f32.mrb[0].mxu0
  %v538 = vadd.f32 0.0, %v537
  %v539 = vpop.f32.mrb[0].mxu0
  %540 = vmatprep.mubr.bf16.mxu0 %v277
  %541 = vmatmul.mubr.bf16.gmra.mrb[0].mxu0 %v276
  %v542 = vpop.f32.mrb[0].mxu0
  %v543 = vadd.f32 0.0, %v542
  %v544 = vpop.f32.mrb[0].mxu0
  %v545 = vpop.f32.mrb[0].mxu0
  %v546 = vadd.f32 0.0, %v545
  %v547 = vpop.f32.mrb[0].mxu0
  %548 = vmatprep.mubr.bf16.mxu0 %v279
  %549 = vmatmul.mubr.bf16.gmra.mrb[0].mxu0 %v278
  %v550 = vpop.f32.mrb[0].mxu0
  %v551 = vadd.f32 0.0, %v550
  %v552 = vpop.f32.mrb[0].mxu0
  %v553 = vpop.f32.mrb[0].mxu0
  %v554 = vadd.f32 0.0, %v553
  %v555 = vpop.f32.mrb[0].mxu0
  %556 = vmatprep.mubr.bf16.mxu0 %v281
  %557 = vmatmul.mubr.bf16.gmra.mrb[0].mxu0 %v280
  %v558 = vpop.f32.mrb[0].mxu0
  %v559 = vadd.f32 0.0, %v558
  %v560 = vpop.f32.mrb[0].mxu0
  %v561 = vpop.f32.mrb[0].mxu0
  %v562 = vadd.f32 0.0, %v561
  %v563 = vpop.f32.mrb[0].mxu0
  %564 = vmatprep.mubr.bf16.mxu0 %v283
  %565 = vmatmul.mubr.bf16.gmra.mrb[0].mxu0 %v282
  %v566 = vpop.f32.mrb[0].mxu0
  %v567 = vadd.f32 0.0, %v566
  %v568 = vpop.f32.mrb[0].mxu0
  %v569 = vpop.f32.mrb[0].mxu0
  %v570 = vadd.f32 0.0, %v569
  %v571 = vpop.f32.mrb[0].mxu0
  %572 = vdwg.mxu0
  %v573 = vadd.f32 %v60, %v447
  %v574 = vadd.f32 %v61, %v450
  %v575 = vadd.f32 %v62, %v455
  %v576 = vadd.f32 %v63, %v458
  %v577 = vadd.f32 %v64, %v463
  %v578 = vadd.f32 %v65, %v466
  %v579 = vadd.f32 %v66, %v471
  %v580 = vadd.f32 %v67, %v474
  %v581 = vadd.f32 %v68, %v479
  %v582 = vadd.f32 %v69, %v482
  %v583 = vadd.f32 %v70, %v487
  %v584 = vadd.f32 %v71, %v490
  %v585 = vadd.f32 %v72, %v495
  %v586 = vadd.f32 %v73, %v498
  %v587 = vadd.f32 %v74, %v503
  %v588 = vadd.f32 %v75, %v506
  %v589 = vadd.f32 %v76, %v511
  %v590 = vadd.f32 %v77, %v514
  %v591 = vadd.f32 %v78, %v519
  %v592 = vadd.f32 %v79, %v522
  %v593 = vadd.f32 %v80, %v527
  %v594 = vadd.f32 %v81, %v530
  %v595 = vadd.f32 %v82, %v535
  %v596 = vadd.f32 %v83, %v538
  %v597 = vadd.f32 %v84, %v543
  %v598 = vadd.f32 %v85, %v546
  %v599 = vadd.f32 %v86, %v551
  %v600 = vadd.f32 %v87, %v554
  %v601 = vadd.f32 %v88, %v559
  %v602 = vadd.f32 %v89, %v562
  %v603 = vadd.f32 %v90, %v567
  %v604 = vadd.f32 %v91, %v570
  %605 = vst [vmem:[#allocation2] sm:$0xff] %v573
  %606 = vst [vmem:[#allocation2 + $0x8] sm:$0xff] %v574
  %607 = vst [vmem:[#allocation2 + $0x10] sm:$0xff] %v575
  %608 = vst [vmem:[#allocation2 + $0x18] sm:$0xff] %v576
  %609 = vst [vmem:[#allocation2 + $0x20] sm:$0xff] %v577
  %610 = vst [vmem:[#allocation2 + $0x28] sm:$0xff] %v578
  %611 = vst [vmem:[#allocation2 + $0x30] sm:$0xff] %v579
  %612 = vst [vmem:[#allocation2 + $0x38] sm:$0xff] %v580
  %613 = vst [vmem:[#allocation2 + $0x40] sm:$0xff] %v581
  %614 = vst [vmem:[#allocation2 + $0x48] sm:$0xff] %v582
  %615 = vst [vmem:[#allocation2 + $0x50] sm:$0xff] %v583
  %616 = vst [vmem:[#allocation2 + $0x58] sm:$0xff] %v584
  %617 = vst [vmem:[#allocation2 + $0x60] sm:$0xff] %v585
  %618 = vst [vmem:[#allocation2 + $0x68] sm:$0xff] %v586
  %619 = vst [vmem:[#allocation2 + $0x70] sm:$0xff] %v587
  %620 = vst [vmem:[#allocation2 + $0x78] sm:$0xff] %v588
  %621 = vst [vmem:[#allocation2 + $0x80] sm:$0xff] %v589
  %622 = vst [vmem:[#allocation2 + $0x88] sm:$0xff] %v590
  %623 = vst [vmem:[#allocation2 + $0x90] sm:$0xff] %v591
  %624 = vst [vmem:[#allocation2 + $0x98] sm:$0xff] %v592
  %625 = vst [vmem:[#allocation2 + $0xa0] sm:$0xff] %v593
  %626 = vst [vmem:[#allocation2 + $0xa8] sm:$0xff] %v594
  %627 = vst [vmem:[#allocation2 + $0xb0] sm:$0xff] %v595
  %628 = vst [vmem:[#allocation2 + $0xb8] sm:$0xff] %v596
  %629 = vst [vmem:[#allocation2 + $0xc0] sm:$0xff] %v597
  %630 = vst [vmem:[#allocation2 + $0xc8] sm:$0xff] %v598
  %631 = vst [vmem:[#allocation2 + $0xd0] sm:$0xff] %v599
  %632 = vst [vmem:[#allocation2 + $0xd8] sm:$0xff] %v600
  %633 = vst [vmem:[#allocation2 + $0xe0] sm:$0xff] %v601
  %634 = vst [vmem:[#allocation2 + $0xe8] sm:$0xff] %v602
  %635 = vst [vmem:[#allocation2 + $0xf0] sm:$0xff] %v603
  %636 = vst [vmem:[#allocation2 + $0xf8] sm:$0xff] %v604
  // Predicated region
  $region30: #{gin_forward.5} parent=0 // pred_check
    %p637 = pneg %p24
  $region31: #{gin_forward.5} parent=0 // pred_check_branch
    %639 = sbr.rel (%p637) target = $region33
  $region32: #{gin_forward.5} parent=0 // pred_region
    %v640 = vld [vmem:[#allocation2] sm:$0xff]
    %v641 = vld [vmem:[#allocation2 + $0x8] sm:$0xff]
    %v642 = vld [vmem:[#allocation2 + $0x10] sm:$0xff]
    %v643 = vld [vmem:[#allocation2 + $0x18] sm:$0xff]
    %v644 = vld [vmem:[#allocation2 + $0x20] sm:$0xff]
    %v645 = vld [vmem:[#allocation2 + $0x28] sm:$0xff]
    %v646 = vld [vmem:[#allocation2 + $0x30] sm:$0xff]
    %v647 = vld [vmem:[#allocation2 + $0x38] sm:$0xff]
    %v648 = vld [vmem:[#allocation2 + $0x40] sm:$0xff]
    %v649 = vld [vmem:[#allocation2 + $0x48] sm:$0xff]
    %v650 = vld [vmem:[#allocation2 + $0x50] sm:$0xff]
    %v651 = vld [vmem:[#allocation2 + $0x58] sm:$0xff]
    %v652 = vld [vmem:[#allocation2 + $0x60] sm:$0xff]
    %v653 = vld [vmem:[#allocation2 + $0x68] sm:$0xff]
    %v654 = vld [vmem:[#allocation2 + $0x70] sm:$0xff]
    %v655 = vld [vmem:[#allocation2 + $0x78] sm:$0xff]
    %v656 = vld [vmem:[#allocation2 + $0x80] sm:$0xff]
    %v657 = vld [vmem:[#allocation2 + $0x88] sm:$0xff]
    %v658 = vld [vmem:[#allocation2 + $0x90] sm:$0xff]
    %v659 = vld [vmem:[#allocation2 + $0x98] sm:$0xff]
    %v660 = vld [vmem:[#allocation2 + $0xa0] sm:$0xff]
    %v661 = vld [vmem:[#allocation2 + $0xa8] sm:$0xff]
    %v662 = vld [vmem:[#allocation2 + $0xb0] sm:$0xff]
    %v663 = vld [vmem:[#allocation2 + $0xb8] sm:$0xff]
    %v664 = vld [vmem:[#allocation2 + $0xc0] sm:$0xff]
    %v665 = vld [vmem:[#allocation2 + $0xc8] sm:$0xff]
    %v666 = vld [vmem:[#allocation2 + $0xd0] sm:$0xff]
    %v667 = vld [vmem:[#allocation2 + $0xd8] sm:$0xff]
    %v668 = vld [vmem:[#allocation2 + $0xe0] sm:$0xff]
    %v669 = vld [vmem:[#allocation2 + $0xe8] sm:$0xff]
    %v670 = vld [vmem:[#allocation2 + $0xf0] sm:$0xff]
    %v671 = vld [vmem:[#allocation2 + $0xf8] sm:$0xff]
    %v672 = vpack.c.bf16 %v641, %v640
    %v673 = vpack.c.bf16 %v643, %v642
    %v674 = vpack.c.bf16 %v645, %v644
    %v675 = vpack.c.bf16 %v647, %v646
    %v676 = vpack.c.bf16 %v649, %v648
    %v677 = vpack.c.bf16 %v651, %v650
    %v678 = vpack.c.bf16 %v653, %v652
    %v679 = vpack.c.bf16 %v655, %v654
    %v680 = vpack.c.bf16 %v657, %v656
    %v681 = vpack.c.bf16 %v659, %v658
    %v682 = vpack.c.bf16 %v661, %v660
    %v683 = vpack.c.bf16 %v663, %v662
    %v684 = vpack.c.bf16 %v665, %v664
    %v685 = vpack.c.bf16 %v667, %v666
    %v686 = vpack.c.bf16 %v669, %v668
    %v687 = vpack.c.bf16 %v671, %v670
    %v688 = vld [vmem:[%s2] sm:$0xf]
    %v689 = vld [vmem:[%s2 + $0x4] sm:$0xf]
    %v690 = vld [vmem:[%s2 + $0x8] sm:$0xf]
    %v691 = vld [vmem:[%s2 + $0xc] sm:$0xf]
    %v692 = vld [vmem:[%s2 + $0x10] sm:$0xf]
    %v693 = vld [vmem:[%s2 + $0x14] sm:$0xf]
    %v694 = vld [vmem:[%s2 + $0x18] sm:$0xf]
    %v695 = vld [vmem:[%s2 + $0x1c] sm:$0xf]
    %v696 = vld [vmem:[%s2 + $0x20] sm:$0xf]
    %v697 = vld [vmem:[%s2 + $0x24] sm:$0xf]
    %v698 = vld [vmem:[%s2 + $0x28] sm:$0xf]
    %v699 = vld [vmem:[%s2 + $0x2c] sm:$0xf]
    %v700 = vld [vmem:[%s2 + $0x30] sm:$0xf]
    %v701 = vld [vmem:[%s2 + $0x34] sm:$0xf]
    %v702 = vld [vmem:[%s2 + $0x38] sm:$0xf]
    %v703 = vld [vmem:[%s2 + $0x3c] sm:$0xf]
    %v704 = vld [vmem:[%s3] sm:$0x1]
    %v706 = vlaneseq
    %v707 = vshrl.u32 %v706, 7
    %v708 = vsub.s32 0, %v707
    %v709 = vrot.slane %v704, %v708
    %v727 = vunpack.c.l.b16 %v688
    %v728 = vunpack.c.l.b16 %v689
    %v729 = vunpack.c.l.b16 %v690
    %v730 = vunpack.c.l.b16 %v691
    %v731 = vunpack.c.l.b16 %v692
    %v732 = vunpack.c.l.b16 %v693
    %v733 = vunpack.c.l.b16 %v694
    %v734 = vunpack.c.l.b16 %v695
    %v735 = vunpack.c.l.b16 %v696
    %v736 = vunpack.c.l.b16 %v697
    %v737 = vunpack.c.l.b16 %v698
    %v738 = vunpack.c.l.b16 %v699
    %v739 = vunpack.c.l.b16 %v700
    %v740 = vunpack.c.l.b16 %v701
    %v741 = vunpack.c.l.b16 %v702
    %v742 = vunpack.c.l.b16 %v703
    %v743 = vpack.c.b16 %v728, %v727
    %v744 = vpack.c.b16 %v730, %v729
    %v745 = vpack.c.b16 %v732, %v731
    %v746 = vpack.c.b16 %v734, %v733
    %v747 = vpack.c.b16 %v736, %v735
    %v748 = vpack.c.b16 %v738, %v737
    %v749 = vpack.c.b16 %v740, %v739
    %v750 = vpack.c.b16 %v742, %v741
    %759 = vmatprep.subr.bf16.mxu0 0
    %760 = vmatpush1.bf16.msra.mxu0 %v743
    %761 = vmatprep.subr.bf16.mxu0 0
    %762 = vmatpush1.bf16.msra.mxu0 %v744
    %763 = vmatprep.subr.bf16.mxu0 0
    %764 = vmatpush1.bf16.msra.mxu0 %v745
    %765 = vmatprep.subr.bf16.mxu0 0
    %766 = vmatpush1.bf16.msra.mxu0 %v746
    %767 = vmatprep.subr.bf16.mxu0 0
    %768 = vmatpush1.bf16.msra.mxu0 %v747
    %769 = vmatprep.subr.bf16.mxu0 0
    %770 = vmatpush1.bf16.msra.mxu0 %v748
    %771 = vmatprep.subr.bf16.mxu0 0
    %772 = vmatpush1.bf16.msra.mxu0 %v749
    %773 = vmatprep.subr.bf16.mxu0 0
    %774 = vmatpush1.bf16.msra.mxu0 %v750
    %775 = vmatprep.subr.bf16.mxu0 0
    %776 = vmatpush1.bf16.msra.mxu0 0
    %777 = vmatprep.subr.bf16.mxu0 0
    %778 = vmatpush1.bf16.msra.mxu0 0
    %779 = vmatprep.subr.bf16.mxu0 0
    %780 = vmatpush1.bf16.msra.mxu0 0
    %781 = vmatprep.subr.bf16.mxu0 0
    %782 = vmatpush1.bf16.msra.mxu0 0
    %783 = vmatprep.subr.bf16.mxu0 0
    %784 = vmatpush1.bf16.msra.mxu0 0
    %785 = vmatprep.subr.bf16.mxu0 0
    %786 = vmatpush1.bf16.msra.mxu0 0
    %787 = vmatprep.subr.bf16.mxu0 0
    %788 = vmatpush1.bf16.msra.mxu0 0
    %789 = vmatprep.subr.bf16.mxu0 0
    %790 = vmatpush1.bf16.msra.mxu0 0
    %791 = vmatprep.mubr.bf16.mxu0 0
    %792 = vmatmul.mubr.bf16.gmra.mrb[0].mxu0 %v672
    %v793 = vpop.f32.mrb[0].mxu0
    %v794 = vadd.f32 %v709, %v793
    %v795 = vpop.f32.mrb[0].mxu0
    %v796 = vpop.f32.mrb[0].mxu0
    %v797 = vadd.f32 %v709, %v796
    %v798 = vpop.f32.mrb[0].mxu0
    %799 = vmatprep.mubr.bf16.mxu0 0
    %800 = vmatmul.mubr.bf16.gmra.mrb[0].mxu0 %v673
    %v801 = vpop.f32.mrb[0].mxu0
    %v802 = vadd.f32 %v709, %v801
    %v803 = vpop.f32.mrb[0].mxu0
    %v804 = vpop.f32.mrb[0].mxu0
    %v805 = vadd.f32 %v709, %v804
    %v806 = vpop.f32.mrb[0].mxu0
    %807 = vmatprep.mubr.bf16.mxu0 0
    %808 = vmatmul.mubr.bf16.gmra.mrb[0].mxu0 %v674
    %v809 = vpop.f32.mrb[0].mxu0
    %v810 = vadd.f32 %v709, %v809
    %v811 = vpop.f32.mrb[0].mxu0
    %v812 = vpop.f32.mrb[0].mxu0
    %v813 = vadd.f32 %v709, %v812
    %v814 = vpop.f32.mrb[0].mxu0
    %815 = vmatprep.mubr.bf16.mxu0 0
    %816 = vmatmul.mubr.bf16.gmra.mrb[0].mxu0 %v675
    %v817 = vpop.f32.mrb[0].mxu0
    %v818 = vadd.f32 %v709, %v817
    %v819 = vpop.f32.mrb[0].mxu0
    %v820 = vpop.f32.mrb[0].mxu0
    %v821 = vadd.f32 %v709, %v820
    %v822 = vpop.f32.mrb[0].mxu0
    %823 = vmatprep.mubr.bf16.mxu0 0
    %824 = vmatmul.mubr.bf16.gmra.mrb[0].mxu0 %v676
    %v825 = vpop.f32.mrb[0].mxu0
    %v826 = vadd.f32 %v709, %v825
    %v827 = vpop.f32.mrb[0].mxu0
    %v828 = vpop.f32.mrb[0].mxu0
    %v829 = vadd.f32 %v709, %v828
    %v830 = vpop.f32.mrb[0].mxu0
    %831 = vmatprep.mubr.bf16.mxu0 0
    %832 = vmatmul.mubr.bf16.gmra.mrb[0].mxu0 %v677
    %v833 = vpop.f32.mrb[0].mxu0
    %v834 = vadd.f32 %v709, %v833
    %v835 = vpop.f32.mrb[0].mxu0
    %v836 = vpop.f32.mrb[0].mxu0
    %v837 = vadd.f32 %v709, %v836
    %v838 = vpop.f32.mrb[0].mxu0
    %839 = vmatprep.mubr.bf16.mxu0 0
    %840 = vmatmul.mubr.bf16.gmra.mrb[0].mxu0 %v678
    %v841 = vpop.f32.mrb[0].mxu0
    %v842 = vadd.f32 %v709, %v841
    %v843 = vpop.f32.mrb[0].mxu0
    %v844 = vpop.f32.mrb[0].mxu0
    %v845 = vadd.f32 %v709, %v844
    %v846 = vpop.f32.mrb[0].mxu0
    %847 = vmatprep.mubr.bf16.mxu0 0
    %848 = vmatmul.mubr.bf16.gmra.mrb[0].mxu0 %v679
    %v849 = vpop.f32.mrb[0].mxu0
    %v850 = vadd.f32 %v709, %v849
    %v851 = vpop.f32.mrb[0].mxu0
    %v852 = vpop.f32.mrb[0].mxu0
    %v853 = vadd.f32 %v709, %v852
    %v854 = vpop.f32.mrb[0].mxu0
    %855 = vmatprep.mubr.bf16.mxu0 0
    %856 = vmatmul.mubr.bf16.gmra.mrb[0].mxu0 %v680
    %v857 = vpop.f32.mrb[0].mxu0
    %v858 = vadd.f32 %v709, %v857
    %v859 = vpop.f32.mrb[0].mxu0
    %v860 = vpop.f32.mrb[0].mxu0
    %v861 = vadd.f32 %v709, %v860
    %v862 = vpop.f32.mrb[0].mxu0
    %863 = vmatprep.mubr.bf16.mxu0 0
    %864 = vmatmul.mubr.bf16.gmra.mrb[0].mxu0 %v681
    %v865 = vpop.f32.mrb[0].mxu0
    %v866 = vadd.f32 %v709, %v865
    %v867 = vpop.f32.mrb[0].mxu0
    %v868 = vpop.f32.mrb[0].mxu0
    %v869 = vadd.f32 %v709, %v868
    %v870 = vpop.f32.mrb[0].mxu0
    %871 = vmatprep.mubr.bf16.mxu0 0
    %872 = vmatmul.mubr.bf16.gmra.mrb[0].mxu0 %v682
    %v873 = vpop.f32.mrb[0].mxu0
    %v874 = vadd.f32 %v709, %v873
    %v875 = vpop.f32.mrb[0].mxu0
    %v876 = vpop.f32.mrb[0].mxu0
    %v877 = vadd.f32 %v709, %v876
    %v878 = vpop.f32.mrb[0].mxu0
    %879 = vmatprep.mubr.bf16.mxu0 0
    %880 = vmatmul.mubr.bf16.gmra.mrb[0].mxu0 %v683
    %v881 = vpop.f32.mrb[0].mxu0
    %v882 = vadd.f32 %v709, %v881
    %v883 = vpop.f32.mrb[0].mxu0
    %v884 = vpop.f32.mrb[0].mxu0
    %v885 = vadd.f32 %v709, %v884
    %v886 = vpop.f32.mrb[0].mxu0
    %887 = vmatprep.mubr.bf16.mxu0 0
    %888 = vmatmul.mubr.bf16.gmra.mrb[0].mxu0 %v684
    %v889 = vpop.f32.mrb[0].mxu0
    %v890 = vadd.f32 %v709, %v889
    %v891 = vpop.f32.mrb[0].mxu0
    %v892 = vpop.f32.mrb[0].mxu0
    %v893 = vadd.f32 %v709, %v892
    %v894 = vpop.f32.mrb[0].mxu0
    %895 = vmatprep.mubr.bf16.mxu0 0
    %896 = vmatmul.mubr.bf16.gmra.mrb[0].mxu0 %v685
    %v897 = vpop.f32.mrb[0].mxu0
    %v898 = vadd.f32 %v709, %v897
    %v899 = vpop.f32.mrb[0].mxu0
    %v900 = vpop.f32.mrb[0].mxu0
    %v901 = vadd.f32 %v709, %v900
    %v902 = vpop.f32.mrb[0].mxu0
    %903 = vmatprep.mubr.bf16.mxu0 0
    %904 = vmatmul.mubr.bf16.gmra.mrb[0].mxu0 %v686
    %v905 = vpop.f32.mrb[0].mxu0
    %v906 = vadd.f32 %v709, %v905
    %v907 = vpop.f32.mrb[0].mxu0
    %v908 = vpop.f32.mrb[0].mxu0
    %v909 = vadd.f32 %v709, %v908
    %v910 = vpop.f32.mrb[0].mxu0
    %911 = vmatprep.mubr.bf16.mxu0 0
    %912 = vmatmul.mubr.bf16.gmra.mrb[0].mxu0 %v687
    %v913 = vpop.f32.mrb[0].mxu0
    %v914 = vadd.f32 %v709, %v913
    %v915 = vpop.f32.mrb[0].mxu0
    %v916 = vpop.f32.mrb[0].mxu0
    %v917 = vadd.f32 %v709, %v916
    %v918 = vpop.f32.mrb[0].mxu0
    %919 = vdwg.mxu0
    %v920 = vmax.f32 %v794, 0.0
    %v921 = vmax.f32 %v797, 0.0
    %v922 = vmax.f32 %v802, 0.0
    %v923 = vmax.f32 %v805, 0.0
    %v924 = vmax.f32 %v810, 0.0
    %v925 = vmax.f32 %v813, 0.0
    %v926 = vmax.f32 %v818, 0.0
    %v927 = vmax.f32 %v821, 0.0
    %v928 = vmax.f32 %v826, 0.0
    %v929 = vmax.f32 %v829, 0.0
    %v930 = vmax.f32 %v834, 0.0
    %v931 = vmax.f32 %v837, 0.0
    %v932 = vmax.f32 %v842, 0.0
    %v933 = vmax.f32 %v845, 0.0
    %v934 = vmax.f32 %v850, 0.0
    %v935 = vmax.f32 %v853, 0.0
    %v936 = vmax.f32 %v858, 0.0
    %v937 = vmax.f32 %v861, 0.0
    %v938 = vmax.f32 %v866, 0.0
    %v939 = vmax.f32 %v869, 0.0
    %v940 = vmax.f32 %v874, 0.0
    %v941 = vmax.f32 %v877, 0.0
    %v942 = vmax.f32 %v882, 0.0
    %v943 = vmax.f32 %v885, 0.0
    %v944 = vmax.f32 %v890, 0.0
    %v945 = vmax.f32 %v893, 0.0
    %v946 = vmax.f32 %v898, 0.0
    %v947 = vmax.f32 %v901, 0.0
    %v948 = vmax.f32 %v906, 0.0
    %v949 = vmax.f32 %v909, 0.0
    %v950 = vmax.f32 %v914, 0.0
    %v951 = vmax.f32 %v917, 0.0
    %v952 = vpack.c.bf16 %v921, %v920
    %v953 = vpack.c.bf16 %v923, %v922
    %v954 = vpack.c.bf16 %v925, %v924
    %v955 = vpack.c.bf16 %v927, %v926
    %v956 = vpack.c.bf16 %v929, %v928
    %v957 = vpack.c.bf16 %v931, %v930
    %v958 = vpack.c.bf16 %v933, %v932
    %v959 = vpack.c.bf16 %v935, %v934
    %v960 = vpack.c.bf16 %v937, %v936
    %v961 = vpack.c.bf16 %v939, %v938
    %v962 = vpack.c.bf16 %v941, %v940
    %v963 = vpack.c.bf16 %v943, %v942
    %v964 = vpack.c.bf16 %v945, %v944
    %v965 = vpack.c.bf16 %v947, %v946
    %v966 = vpack.c.bf16 %v949, %v948
    %v967 = vpack.c.bf16 %v951, %v950
    %v968 = vld [vmem:[%s4] sm:$0xf]
    %v969 = vld [vmem:[%s4 + $0x4] sm:$0xf]
    %v970 = vld [vmem:[%s4 + $0x8] sm:$0xf]
    %v971 = vld [vmem:[%s4 + $0xc] sm:$0xf]
    %v972 = vld [vmem:[%s4 + $0x10] sm:$0xf]
    %v973 = vld [vmem:[%s4 + $0x14] sm:$0xf]
    %v974 = vld [vmem:[%s4 + $0x18] sm:$0xf]
    %v975 = vld [vmem:[%s4 + $0x1c] sm:$0xf]
    %v976 = vld [vmem:[%s4 + $0x20] sm:$0xf]
    %v977 = vld [vmem:[%s4 + $0x24] sm:$0xf]
    %v978 = vld [vmem:[%s4 + $0x28] sm:$0xf]
    %v979 = vld [vmem:[%s4 + $0x2c] sm:$0xf]
    %v980 = vld [vmem:[%s4 + $0x30] sm:$0xf]
    %v981 = vld [vmem:[%s4 + $0x34] sm:$0xf]
    %v982 = vld [vmem:[%s4 + $0x38] sm:$0xf]
    %v983 = vld [vmem:[%s4 + $0x3c] sm:$0xf]
    %v984 = vld [vmem:[%s5] sm:$0x1]
    %v986 = vlaneseq
    %v987 = vshrl.u32 %v986, 7
    %v988 = vsub.s32 0, %v987
    %v989 = vrot.slane %v984, %v988
    %v1007 = vunpack.c.l.b16 %v968
    %v1008 = vunpack.c.l.b16 %v969
    %v1009 = vunpack.c.l.b16 %v970
    %v1010 = vunpack.c.l.b16 %v971
    %v1011 = vunpack.c.l.b16 %v972
    %v1012 = vunpack.c.l.b16 %v973
    %v1013 = vunpack.c.l.b16 %v974
    %v1014 = vunpack.c.l.b16 %v975
    %v1015 = vunpack.c.l.b16 %v976
    %v1016 = vunpack.c.l.b16 %v977
    %v1017 = vunpack.c.l.b16 %v978
    %v1018 = vunpack.c.l.b16 %v979
    %v1019 = vunpack.c.l.b16 %v980
    %v1020 = vunpack.c.l.b16 %v981
    %v1021 = vunpack.c.l.b16 %v982
    %v1022 = vunpack.c.l.b16 %v983
    %v1023 = vpack.c.b16 %v1008, %v1007
    %v1024 = vpack.c.b16 %v1010, %v1009
    %v1025 = vpack.c.b16 %v1012, %v1011
    %v1026 = vpack.c.b16 %v1014, %v1013
    %v1027 = vpack.c.b16 %v1016, %v1015
    %v1028 = vpack.c.b16 %v1018, %v1017
    %v1029 = vpack.c.b16 %v1020, %v1019
    %v1030 = vpack.c.b16 %v1022, %v1021
    %1039 = vmatprep.subr.bf16.mxu0 0
    %1040 = vmatpush1.bf16.msra.mxu0 %v1023
    %1041 = vmatprep.subr.bf16.mxu0 0
    %1042 = vmatpush1.bf16.msra.mxu0 %v1024
    %1043 = vmatprep.subr.bf16.mxu0 0
    %1044 = vmatpush1.bf16.msra.mxu0 %v1025
    %1045 = vmatprep.subr.bf16.mxu0 0
    %1046 = vmatpush1.bf16.msra.mxu0 %v1026
    %1047 = vmatprep.subr.bf16.mxu0 0
    %1048 = vmatpush1.bf16.msra.mxu0 %v1027
    %1049 = vmatprep.subr.bf16.mxu0 0
    %1050 = vmatpush1.bf16.msra.mxu0 %v1028
    %1051 = vmatprep.subr.bf16.mxu0 0
    %1052 = vmatpush1.bf16.msra.mxu0 %v1029
    %1053 = vmatprep.subr.bf16.mxu0 0
    %1054 = vmatpush1.bf16.msra.mxu0 %v1030
    %1055 = vmatprep.subr.bf16.mxu0 0
    %1056 = vmatpush1.bf16.msra.mxu0 0
    %1057 = vmatprep.subr.bf16.mxu0 0
    %1058 = vmatpush1.bf16.msra.mxu0 0
    %1059 = vmatprep.subr.bf16.mxu0 0
    %1060 = vmatpush1.bf16.msra.mxu0 0
    %1061 = vmatprep.subr.bf16.mxu0 0
    %1062 = vmatpush1.bf16.msra.mxu0 0
    %1063 = vmatprep.subr.bf16.mxu0 0
    %1064 = vmatpush1.bf16.msra.mxu0 0
    %1065 = vmatprep.subr.bf16.mxu0 0
    %1066 = vmatpush1.bf16.msra.mxu0 0
    %1067 = vmatprep.subr.bf16.mxu0 0
    %1068 = vmatpush1.bf16.msra.mxu0 0
    %1069 = vmatprep.subr.bf16.mxu0 0
    %1070 = vmatpush1.bf16.msra.mxu0 0
    %1071 = vmatprep.mubr.bf16.mxu0 0
    %1072 = vmatmul.mubr.bf16.gmra.mrb[0].mxu0 %v952
    %v1073 = vpop.f32.mrb[0].mxu0
    %v1074 = vadd.f32 %v989, %v1073
    %v1075 = vpop.f32.mrb[0].mxu0
    %v1076 = vpop.f32.mrb[0].mxu0
    %v1077 = vadd.f32 %v989, %v1076
    %v1078 = vpop.f32.mrb[0].mxu0
    %1079 = vmatprep.mubr.bf16.mxu0 0
    %1080 = vmatmul.mubr.bf16.gmra.mrb[0].mxu0 %v953
    %v1081 = vpop.f32.mrb[0].mxu0
    %v1082 = vadd.f32 %v989, %v1081
    %v1083 = vpop.f32.mrb[0].mxu0
    %v1084 = vpop.f32.mrb[0].mxu0
    %v1085 = vadd.f32 %v989, %v1084
    %v1086 = vpop.f32.mrb[0].mxu0
    %1087 = vmatprep.mubr.bf16.mxu0 0
    %1088 = vmatmul.mubr.bf16.gmra.mrb[0].mxu0 %v954
    %v1089 = vpop.f32.mrb[0].mxu0
    %v1090 = vadd.f32 %v989, %v1089
    %v1091 = vpop.f32.mrb[0].mxu0
    %v1092 = vpop.f32.mrb[0].mxu0
    %v1093 = vadd.f32 %v989, %v1092
    %v1094 = vpop.f32.mrb[0].mxu0
    %1095 = vmatprep.mubr.bf16.mxu0 0
    %1096 = vmatmul.mubr.bf16.gmra.mrb[0].mxu0 %v955
    %v1097 = vpop.f32.mrb[0].mxu0
    %v1098 = vadd.f32 %v989, %v1097
    %v1099 = vpop.f32.mrb[0].mxu0
    %v1100 = vpop.f32.mrb[0].mxu0
    %v1101 = vadd.f32 %v989, %v1100
    %v1102 = vpop.f32.mrb[0].mxu0
    %1103 = vmatprep.mubr.bf16.mxu0 0
    %1104 = vmatmul.mubr.bf16.gmra.mrb[0].mxu0 %v956
    %v1105 = vpop.f32.mrb[0].mxu0
    %v1106 = vadd.f32 %v989, %v1105
    %v1107 = vpop.f32.mrb[0].mxu0
    %v1108 = vpop.f32.mrb[0].mxu0
    %v1109 = vadd.f32 %v989, %v1108
    %v1110 = vpop.f32.mrb[0].mxu0
    %1111 = vmatprep.mubr.bf16.mxu0 0
    %1112 = vmatmul.mubr.bf16.gmra.mrb[0].mxu0 %v957
    %v1113 = vpop.f32.mrb[0].mxu0
    %v1114 = vadd.f32 %v989, %v1113
    %v1115 = vpop.f32.mrb[0].mxu0
    %v1116 = vpop.f32.mrb[0].mxu0
    %v1117 = vadd.f32 %v989, %v1116
    %v1118 = vpop.f32.mrb[0].mxu0
    %1119 = vmatprep.mubr.bf16.mxu0 0
    %1120 = vmatmul.mubr.bf16.gmra.mrb[0].mxu0 %v958
    %v1121 = vpop.f32.mrb[0].mxu0
    %v1122 = vadd.f32 %v989, %v1121
    %v1123 = vpop.f32.mrb[0].mxu0
    %v1124 = vpop.f32.mrb[0].mxu0
    %v1125 = vadd.f32 %v989, %v1124
    %v1126 = vpop.f32.mrb[0].mxu0
    %1127 = vmatprep.mubr.bf16.mxu0 0
    %1128 = vmatmul.mubr.bf16.gmra.mrb[0].mxu0 %v959
    %v1129 = vpop.f32.mrb[0].mxu0
    %v1130 = vadd.f32 %v989, %v1129
    %v1131 = vpop.f32.mrb[0].mxu0
    %v1132 = vpop.f32.mrb[0].mxu0
    %v1133 = vadd.f32 %v989, %v1132
    %v1134 = vpop.f32.mrb[0].mxu0
    %1135 = vmatprep.mubr.bf16.mxu0 0
    %1136 = vmatmul.mubr.bf16.gmra.mrb[0].mxu0 %v960
    %v1137 = vpop.f32.mrb[0].mxu0
    %v1138 = vadd.f32 %v989, %v1137
    %v1139 = vpop.f32.mrb[0].mxu0
    %v1140 = vpop.f32.mrb[0].mxu0
    %v1141 = vadd.f32 %v989, %v1140
    %v1142 = vpop.f32.mrb[0].mxu0
    %1143 = vmatprep.mubr.bf16.mxu0 0
    %1144 = vmatmul.mubr.bf16.gmra.mrb[0].mxu0 %v961
    %v1145 = vpop.f32.mrb[0].mxu0
    %v1146 = vadd.f32 %v989, %v1145
    %v1147 = vpop.f32.mrb[0].mxu0
    %v1148 = vpop.f32.mrb[0].mxu0
    %v1149 = vadd.f32 %v989, %v1148
    %v1150 = vpop.f32.mrb[0].mxu0
    %1151 = vmatprep.mubr.bf16.mxu0 0
    %1152 = vmatmul.mubr.bf16.gmra.mrb[0].mxu0 %v962
    %v1153 = vpop.f32.mrb[0].mxu0
    %v1154 = vadd.f32 %v989, %v1153
    %v1155 = vpop.f32.mrb[0].mxu0
    %v1156 = vpop.f32.mrb[0].mxu0
    %v1157 = vadd.f32 %v989, %v1156
    %v1158 = vpop.f32.mrb[0].mxu0
    %1159 = vmatprep.mubr.bf16.mxu0 0
    %1160 = vmatmul.mubr.bf16.gmra.mrb[0].mxu0 %v963
    %v1161 = vpop.f32.mrb[0].mxu0
    %v1162 = vadd.f32 %v989, %v1161
    %v1163 = vpop.f32.mrb[0].mxu0
    %v1164 = vpop.f32.mrb[0].mxu0
    %v1165 = vadd.f32 %v989, %v1164
    %v1166 = vpop.f32.mrb[0].mxu0
    %1167 = vmatprep.mubr.bf16.mxu0 0
    %1168 = vmatmul.mubr.bf16.gmra.mrb[0].mxu0 %v964
    %v1169 = vpop.f32.mrb[0].mxu0
    %v1170 = vadd.f32 %v989, %v1169
    %v1171 = vpop.f32.mrb[0].mxu0
    %v1172 = vpop.f32.mrb[0].mxu0
    %v1173 = vadd.f32 %v989, %v1172
    %v1174 = vpop.f32.mrb[0].mxu0
    %1175 = vmatprep.mubr.bf16.mxu0 0
    %1176 = vmatmul.mubr.bf16.gmra.mrb[0].mxu0 %v965
    %v1177 = vpop.f32.mrb[0].mxu0
    %v1178 = vadd.f32 %v989, %v1177
    %v1179 = vpop.f32.mrb[0].mxu0
    %v1180 = vpop.f32.mrb[0].mxu0
    %v1181 = vadd.f32 %v989, %v1180
    %v1182 = vpop.f32.mrb[0].mxu0
    %1183 = vmatprep.mubr.bf16.mxu0 0
    %1184 = vmatmul.mubr.bf16.gmra.mrb[0].mxu0 %v966
    %v1185 = vpop.f32.mrb[0].mxu0
    %v1186 = vadd.f32 %v989, %v1185
    %v1187 = vpop.f32.mrb[0].mxu0
    %v1188 = vpop.f32.mrb[0].mxu0
    %v1189 = vadd.f32 %v989, %v1188
    %v1190 = vpop.f32.mrb[0].mxu0
    %1191 = vmatprep.mubr.bf16.mxu0 0
    %1192 = vmatmul.mubr.bf16.gmra.mrb[0].mxu0 %v967
    %v1193 = vpop.f32.mrb[0].mxu0
    %v1194 = vadd.f32 %v989, %v1193
    %v1195 = vpop.f32.mrb[0].mxu0
    %v1196 = vpop.f32.mrb[0].mxu0
    %v1197 = vadd.f32 %v989, %v1196
    %v1198 = vpop.f32.mrb[0].mxu0
    %1199 = vdwg.mxu0
    %v1200 = vmax.f32 %v1074, 0.0
    %v1201 = vmax.f32 %v1077, 0.0
    %v1202 = vmax.f32 %v1082, 0.0
    %v1203 = vmax.f32 %v1085, 0.0
    %v1204 = vmax.f32 %v1090, 0.0
    %v1205 = vmax.f32 %v1093, 0.0
    %v1206 = vmax.f32 %v1098, 0.0
    %v1207 = vmax.f32 %v1101, 0.0
    %v1208 = vmax.f32 %v1106, 0.0
    %v1209 = vmax.f32 %v1109, 0.0
    %v1210 = vmax.f32 %v1114, 0.0
    %v1211 = vmax.f32 %v1117, 0.0
    %v1212 = vmax.f32 %v1122, 0.0
    %v1213 = vmax.f32 %v1125, 0.0
    %v1214 = vmax.f32 %v1130, 0.0
    %v1215 = vmax.f32 %v1133, 0.0
    %v1216 = vmax.f32 %v1138, 0.0
    %v1217 = vmax.f32 %v1141, 0.0
    %v1218 = vmax.f32 %v1146, 0.0
    %v1219 = vmax.f32 %v1149, 0.0
    %v1220 = vmax.f32 %v1154, 0.0
    %v1221 = vmax.f32 %v1157, 0.0
    %v1222 = vmax.f32 %v1162, 0.0
    %v1223 = vmax.f32 %v1165, 0.0
    %v1224 = vmax.f32 %v1170, 0.0
    %v1225 = vmax.f32 %v1173, 0.0
    %v1226 = vmax.f32 %v1178, 0.0
    %v1227 = vmax.f32 %v1181, 0.0
    %v1228 = vmax.f32 %v1186, 0.0
    %v1229 = vmax.f32 %v1189, 0.0
    %v1230 = vmax.f32 %v1194, 0.0
    %v1231 = vmax.f32 %v1197, 0.0
    %v1232 = vpack.c.bf16 %v1201, %v1200
    %v1233 = vpack.c.bf16 %v1203, %v1202
    %v1234 = vpack.c.bf16 %v1205, %v1204
    %v1235 = vpack.c.bf16 %v1207, %v1206
    %v1236 = vpack.c.bf16 %v1209, %v1208
    %v1237 = vpack.c.bf16 %v1211, %v1210
    %v1238 = vpack.c.bf16 %v1213, %v1212
    %v1239 = vpack.c.bf16 %v1215, %v1214
    %v1240 = vpack.c.bf16 %v1217, %v1216
    %v1241 = vpack.c.bf16 %v1219, %v1218
    %v1242 = vpack.c.bf16 %v1221, %v1220
    %v1243 = vpack.c.bf16 %v1223, %v1222
    %v1244 = vpack.c.bf16 %v1225, %v1224
    %v1245 = vpack.c.bf16 %v1227, %v1226
    %v1246 = vpack.c.bf16 %v1229, %v1228
    %v1247 = vpack.c.bf16 %v1231, %v1230
    %v1264 = vunpack.c.l.b16 %v1232
    %v1265 = vunpack.c.h.b16 %v1232
    %v1266 = vunpack.c.l.b16 %v1233
    %v1267 = vunpack.c.h.b16 %v1233
    %v1268 = vunpack.c.l.b16 %v1234
    %v1269 = vunpack.c.h.b16 %v1234
    %v1270 = vunpack.c.l.b16 %v1235
    %v1271 = vunpack.c.h.b16 %v1235
    %v1272 = vunpack.c.l.b16 %v1236
    %v1273 = vunpack.c.h.b16 %v1236
    %v1274 = vunpack.c.l.b16 %v1237
    %v1275 = vunpack.c.h.b16 %v1237
    %v1276 = vunpack.c.l.b16 %v1238
    %v1277 = vunpack.c.h.b16 %v1238
    %v1278 = vunpack.c.l.b16 %v1239
    %v1279 = vunpack.c.h.b16 %v1239
    %v1280 = vunpack.c.l.b16 %v1240
    %v1281 = vunpack.c.h.b16 %v1240
    %v1282 = vunpack.c.l.b16 %v1241
    %v1283 = vunpack.c.h.b16 %v1241
    %v1284 = vunpack.c.l.b16 %v1242
    %v1285 = vunpack.c.h.b16 %v1242
    %v1286 = vunpack.c.l.b16 %v1243
    %v1287 = vunpack.c.h.b16 %v1243
    %v1288 = vunpack.c.l.b16 %v1244
    %v1289 = vunpack.c.h.b16 %v1244
    %v1290 = vunpack.c.l.b16 %v1245
    %v1291 = vunpack.c.h.b16 %v1245
    %v1292 = vunpack.c.l.b16 %v1246
    %v1293 = vunpack.c.h.b16 %v1246
    %v1294 = vunpack.c.l.b16 %v1247
    %v1295 = vunpack.c.h.b16 %v1247
    %v1296 = vpack.c.b16 %v1264, %v1264
    %v1297 = vpack.c.b16 %v1265, %v1265
    %v1298 = vpack.c.b16 %v1266, %v1266
    %v1299 = vpack.c.b16 %v1267, %v1267
    %v1300 = vpack.c.b16 %v1268, %v1268
    %v1301 = vpack.c.b16 %v1269, %v1269
    %v1302 = vpack.c.b16 %v1270, %v1270
    %v1303 = vpack.c.b16 %v1271, %v1271
    %v1304 = vpack.c.b16 %v1272, %v1272
    %v1305 = vpack.c.b16 %v1273, %v1273
    %v1306 = vpack.c.b16 %v1274, %v1274
    %v1307 = vpack.c.b16 %v1275, %v1275
    %v1308 = vpack.c.b16 %v1276, %v1276
    %v1309 = vpack.c.b16 %v1277, %v1277
    %v1310 = vpack.c.b16 %v1278, %v1278
    %v1311 = vpack.c.b16 %v1279, %v1279
    %v1312 = vpack.c.b16 %v1280, %v1280
    %v1313 = vpack.c.b16 %v1281, %v1281
    %v1314 = vpack.c.b16 %v1282, %v1282
    %v1315 = vpack.c.b16 %v1283, %v1283
    %v1316 = vpack.c.b16 %v1284, %v1284
    %v1317 = vpack.c.b16 %v1285, %v1285
    %v1318 = vpack.c.b16 %v1286, %v1286
    %v1319 = vpack.c.b16 %v1287, %v1287
    %v1320 = vpack.c.b16 %v1288, %v1288
    %v1321 = vpack.c.b16 %v1289, %v1289
    %v1322 = vpack.c.b16 %v1290, %v1290
    %v1323 = vpack.c.b16 %v1291, %v1291
    %v1324 = vpack.c.b16 %v1292, %v1292
    %v1325 = vpack.c.b16 %v1293, %v1293
    %v1326 = vpack.c.b16 %v1294, %v1294
    %v1327 = vpack.c.b16 %v1295, %v1295
    %1360 = vst [vmem:[%s6] sm:$0xf] %v1296
    %1361 = vst [vmem:[%s6 + $0x4] sm:$0xf] %v1297
    %1362 = vst [vmem:[%s6 + $0x8] sm:$0xf] %v1298
    %1363 = vst [vmem:[%s6 + $0xc] sm:$0xf] %v1299
    %1364 = vst [vmem:[%s6 + $0x10] sm:$0xf] %v1300
    %1365 = vst [vmem:[%s6 + $0x14] sm:$0xf] %v1301
    %1366 = vst [vmem:[%s6 + $0x18] sm:$0xf] %v1302
    %1367 = vst [vmem:[%s6 + $0x1c] sm:$0xf] %v1303
    %1368 = vst [vmem:[%s6 + $0x20] sm:$0xf] %v1304
    %1369 = vst [vmem:[%s6 + $0x24] sm:$0xf] %v1305
    %1370 = vst [vmem:[%s6 + $0x28] sm:$0xf] %v1306
    %1371 = vst [vmem:[%s6 + $0x2c] sm:$0xf] %v1307
    %1372 = vst [vmem:[%s6 + $0x30] sm:$0xf] %v1308
    %1373 = vst [vmem:[%s6 + $0x34] sm:$0xf] %v1309
    %1374 = vst [vmem:[%s6 + $0x38] sm:$0xf] %v1310
    %1375 = vst [vmem:[%s6 + $0x3c] sm:$0xf] %v1311
    %1376 = vst [vmem:[%s6 + $0x40] sm:$0xf] %v1312
    %1377 = vst [vmem:[%s6 + $0x44] sm:$0xf] %v1313
    %1378 = vst [vmem:[%s6 + $0x48] sm:$0xf] %v1314
    %1379 = vst [vmem:[%s6 + $0x4c] sm:$0xf] %v1315
    %1380 = vst [vmem:[%s6 + $0x50] sm:$0xf] %v1316
    %1381 = vst [vmem:[%s6 + $0x54] sm:$0xf] %v1317
    %1382 = vst [vmem:[%s6 + $0x58] sm:$0xf] %v1318
    %1383 = vst [vmem:[%s6 + $0x5c] sm:$0xf] %v1319
    %1384 = vst [vmem:[%s6 + $0x60] sm:$0xf] %v1320
    %1385 = vst [vmem:[%s6 + $0x64] sm:$0xf] %v1321
    %1386 = vst [vmem:[%s6 + $0x68] sm:$0xf] %v1322
    %1387 = vst [vmem:[%s6 + $0x6c] sm:$0xf] %v1323
    %1388 = vst [vmem:[%s6 + $0x70] sm:$0xf] %v1324
    %1389 = vst [vmem:[%s6 + $0x74] sm:$0xf] %v1325
    %1390 = vst [vmem:[%s6 + $0x78] sm:$0xf] %v1326
    %1391 = vst [vmem:[%s6 + $0x7c] sm:$0xf] %v1327
  $region33: #{gin_forward.5} parent=0 // pred_fallthru
    _
  // Predicated region
  $region34: #{gin_forward.5} parent=0 // pred_check
    _
  $region35: #{gin_forward.5} parent=0 // pred_check_branch
    %1393 = sbr.rel (0) target = $region37
  $region36: #{gin_forward.5} parent=0 // pred_region
    _
  $region37: #{gin_forward.5} parent=0 // pred_fallthru
    _
  // Predicated region
  $region38: #{gin_forward.5} parent=0 // pred_check
    _
  $region39: #{gin_forward.5} parent=0 // pred_check_branch
    %1395 = sbr.rel (0) target = $region41
  $region40: #{gin_forward.5} parent=0 // pred_region
    _
  $region41: #{gin_forward.5} parent=0 // pred_fallthru
    _

</llo_original>
